<compile_context>
chip_gen: v6e
topology: v6e:2x2x1
jax: 0.10.0
libtpu: 0.0.40
codegen_flags: <defaults>
</compile_context>

<pallas_src>
import math
import functools

import jax
import jax.numpy as jnp
from jax.experimental import pallas as pl
from jax.experimental.pallas import tpu as pltpu

EPS = 1e-5  # nn.LayerNorm default eps


def _layer_norm(x, gamma, beta):
    mu = jnp.mean(x, axis=-1, keepdims=True)
    var = jnp.mean(jnp.square(x - mu), axis=-1, keepdims=True)
    return (x - mu) * jax.lax.rsqrt(var + EPS) * gamma + beta


def transformer_fusion_kernel(
    xq_ref, xk_ref, xv_ref,
    wq_ref, wk_ref, wv_ref, wproj_ref,
    g1_ref, bt1_ref,
    w1_ref, b1_ref, w2_ref, b2_ref,
    g2_ref, bt2_ref,
    out_ref,
    att_scratch,
    *, head_num, head_dim,
):
    """One grid step == one block of `block_b` batch elements (whole encoder layer)."""
    b_blk, s_q, d = xq_ref.shape
    s_k = xk_ref.shape[1]
    m_q = b_blk * s_q
    m_k = b_blk * s_k

    # ---- fused QKV projections: one wide bf16 matmul per input, f32 accumulation ----
    xq2 = xq_ref[...].reshape(m_q, d)          # (m_q, D) bf16
    xk2 = xk_ref[...].reshape(m_k, d)
    xv2 = xv_ref[...].reshape(m_k, d)

    scale = 1.0 / math.sqrt(head_dim)
    q_all = jnp.dot(xq2, wq_ref[...], preferred_element_type=jnp.float32) * scale
    k_all = jnp.dot(xk2, wk_ref[...], preferred_element_type=jnp.float32)
    v_all = jnp.dot(xv2, wv_ref[...], preferred_element_type=jnp.float32)

    q3 = q_all.reshape(b_blk, s_q, d)          # head h == lane cols [h*E, (h+1)*E)
    k3 = k_all.reshape(b_blk, s_k, d)
    v3 = v_all.reshape(b_blk, s_k, d)

    # ---- per-head attention, batched over the batch block (no k.T, no concat) ----
    for h in range(head_num):                  # static unrolled, head_num is small
        sl = slice(h * head_dim, (h + 1) * head_dim)
        qh = q3[:, :, sl]                      # (b, S_q, E) f32
        kh = k3[:, :, sl]                      # (b, S_k, E)
        vh = v3[:, :, sl]                      # (b, S_k, E)

        s = jnp.einsum("bqe,bke->bqk", qh, kh, preferred_element_type=jnp.float32)
        s = s - jnp.max(s, axis=-1, keepdims=True)
        p = jnp.exp(s)
        denom = jnp.sum(p, axis=-1, keepdims=True)

        # unnormalized p @ v, then deferred normalization via EUP reciprocal
        pv = jnp.einsum("bqk,bke->bqe", p, vh, preferred_element_type=jnp.float32)
        pv = pv * pl.reciprocal(denom, approx=True)

        att_scratch[:, sl] = pv.reshape(m_q, head_dim)

    # ---- head "concat" already laid out in scratch; output projection ----
    att = att_scratch[...].astype(jnp.bfloat16)                      # (m_q, D)
    mh = jnp.dot(att, wproj_ref[...], preferred_element_type=jnp.float32)

    # ---- add & LayerNorm 1 (f32) ----
    out1 = _layer_norm(xq2.astype(jnp.float32) + mh, g1_ref[...], bt1_ref[...])

    # ---- point-wise FFN (bf16 matmuls, f32 accumulation / elementwise) ----
    h1 = jnp.dot(out1.astype(jnp.bfloat16), w1_ref[...],
                 preferred_element_type=jnp.float32) + b1_ref[...]
    h1 = jnp.maximum(h1, 0.0)
    ffn = jnp.dot(h1.astype(jnp.bfloat16), w2_ref[...],
                  preferred_element_type=jnp.float32) + b2_ref[...]

    # ---- add & LayerNorm 2 ----
    out2 = _layer_norm(out1 + ffn, g2_ref[...], bt2_ref[...])

    out_ref[...] = out2.reshape(b_blk, s_q, d).astype(out_ref.dtype)


def _pick_block_b(batch, seq):
    """Aim for >=128 rows per block, but keep >=2 grid steps (v7x has 2 TCs)."""
    target = max(1, 128 // max(seq, 1))
    bb = min(batch, target)
    if batch >= 2:
        bb = min(bb, max(1, batch // 2))
    while batch % bb:
        bb -= 1
    return bb


def transformer_fusion_layer(xq, xk, xv, params, *, block_b=None):
    B, S_q, D = xq.shape
    S_k = xk.shape[1]
    H, _, E = params["wq"].shape
    Dh = params["w1"].shape[1]

    if block_b is None:
        block_b = _pick_block_b(B, S_q)
    grid = (B // block_b,)

    # Head-fused weights: (H, D, E) -> (D, H*E), column block h == head h.
    def fuse(w):
        return jnp.transpose(w, (1, 0, 2)).reshape(D, H * E).astype(jnp.bfloat16)

    wq_all = fuse(params["wq"])
    wk_all = fuse(params["wk"])
    wv_all = fuse(params["wv"])
    wproj = params["wproj"].astype(jnp.bfloat16)
    w1 = params["w1"].astype(jnp.bfloat16)
    w2 = params["w2"].astype(jnp.bfloat16)

    # bf16 activations at the boundary (halves activation DMA bytes).
    xq_b = xq.astype(jnp.bfloat16)
    xk_b = xk.astype(jnp.bfloat16)
    xv_b = xv.astype(jnp.bfloat16)

    kernel = functools.partial(transformer_fusion_kernel, head_num=H, head_dim=E)

    def resident(shape):
        # whole-array block, replicated across the batch grid (stays VMEM-resident)
        return pl.BlockSpec(shape, lambda b, _n=len(shape): (0,) * _n)

    in_specs = [
        pl.BlockSpec((block_b, S_q, D), lambda b: (b, 0, 0)),
        pl.BlockSpec((block_b, S_k, D), lambda b: (b, 0, 0)),
        pl.BlockSpec((block_b, S_k, D), lambda b: (b, 0, 0)),
        resident((D, H * E)),   # W_Q (head-fused)
        resident((D, H * E)),   # W_K (head-fused)
        resident((D, H * E)),   # W_V (head-fused)
        resident((D, D)),       # proj
        resident((1, D)),       # ln1 gamma
        resident((1, D)),       # ln1 beta
        resident((D, Dh)),      # ffn W1
        resident((1, Dh)),      # ffn b1
        resident((Dh, D)),      # ffn W2
        resident((1, D)),       # ffn b2
        resident((1, D)),       # ln2 gamma
        resident((1, D)),       # ln2 beta
    ]
    out_spec = pl.BlockSpec((block_b, S_q, D), lambda b: (b, 0, 0))

    return pl.pallas_call(
        kernel,
        grid=grid,
        in_specs=in_specs,
        out_specs=out_spec,
        out_shape=jax.ShapeDtypeStruct((B, S_q, D), jnp.float32),
        scratch_shapes=[pltpu.VMEM((block_b * S_q, D), jnp.float32)],
        compiler_params=pltpu.CompilerParams(
            dimension_semantics=("parallel",),
            vmem_limit_bytes=32 * 1024 * 1024,  # above v5e's 16 MiB scoped default
        ),
    )(
        xq_b, xk_b, xv_b,
        wq_all, wk_all, wv_all, wproj,
        params["g1"], params["bt1"],
        w1, params["b1"], w2, params["b2"],
        params["g2"], params["bt2"],
    )


def reference(xq, xk, xv, p):
    """Pure-JAX f32 reference mirroring the PyTorch forward."""
    H, D, E = p["wq"].shape
    B, S_q, _ = xq.shape

    Q = jnp.einsum("bsd,hde->hbse", xq, p["wq"])
    K = jnp.einsum("bsd,hde->hbse", xk, p["wk"])
    V = jnp.einsum("bsd,hde->hbse", xv, p["wv"])
    s = jnp.einsum("hbqe,hbke->hbqk", Q, K) / math.sqrt(E)
    a = jax.nn.softmax(s, axis=-1)
    av = jnp.einsum("hbqk,hbke->hbqe", a, V)
    att = jnp.transpose(av, (1, 2, 0, 3)).reshape(B, S_q, D)  # concat heads
    mh = att @ p["wproj"]

    def ln(x, g, b):
        mu = x.mean(-1, keepdims=True)
        var = ((x - mu) ** 2).mean(-1, keepdims=True)
        return (x - mu) / jnp.sqrt(var + EPS) * g + b

    out1 = ln(xq + mh, p["g1"], p["bt1"])
    ffn = jnp.maximum(out1 @ p["w1"] + p["b1"], 0.0) @ p["w2"] + p["b2"]
    return ln(out1 + ffn, p["g2"], p["bt2"])


def init_params(key, input_dim, head_num):
    D = input_dim
    H = head_num
    E = D // H
    Dh = 2 * D
    ks = jax.random.split(key, 8)
    bound_attn = 1.0 / math.sqrt(E)
    u = lambda k, shape, b: jax.random.uniform(k, shape, jnp.float32, -b, b)
    return {
        "wq": u(ks[0], (H, D, E), bound_attn),
        "wk": u(ks[1], (H, D, E), bound_attn),
        "wv": u(ks[2], (H, D, E), bound_attn),
        "wproj": u(ks[3], (D, D), 1.0 / math.sqrt(D)),
        "g1": jnp.ones((1, D), jnp.float32),
        "bt1": jnp.zeros((1, D), jnp.float32),
        "w1": u(ks[4], (D, Dh), 1.0 / math.sqrt(D)),
        "b1": u(ks[5], (1, Dh), 1.0 / math.sqrt(D)),
        "w2": u(ks[6], (Dh, D), 1.0 / math.sqrt(Dh)),
        "b2": u(ks[7], (1, D), 1.0 / math.sqrt(Dh)),
        "g2": jnp.ones((1, D), jnp.float32),
        "bt2": jnp.zeros((1, D), jnp.float32),
    }


if __name__ == "__main__":
    batch, seq, input_dim, head_num = 2, 8, 32, 4

    key = jax.random.PRNGKey(0)
    kx, kp = jax.random.split(key)
    X = jax.random.normal(kx, (batch, seq, input_dim), jnp.float32)
    params = init_params(kp, input_dim, head_num)

    # Q-only path of Transformer_Fusion_Layer.forward: K = V = Q = X
    out = transformer_fusion_layer(X, X, X, params)
    out = jax.block_until_ready(out)

    ref = reference(X, X, X, params)
    assert out.shape == (batch, seq, input_dim)
    max_err = float(jnp.max(jnp.abs(out - ref)))
    # bf16 matmul operands + approx reciprocal -> slightly looser tolerance than pure f32
    assert jnp.allclose(out, ref, rtol=5e-2, atol=5e-2), max_err

    print("KERNEL_OK")
</pallas_src>

<mosaic_0001>
module attributes {stable_mosaic.version = 11 : i64} {
  func.func @transformer_fusion_kernel(%arg0: i32, %arg1: memref<1x8x32xbf16, #tpu.memory_space<vmem>>, %arg2: memref<1x8x32xbf16, #tpu.memory_space<vmem>>, %arg3: memref<1x8x32xbf16, #tpu.memory_space<vmem>>, %arg4: memref<32x32xbf16, #tpu.memory_space<vmem>>, %arg5: memref<32x32xbf16, #tpu.memory_space<vmem>>, %arg6: memref<32x32xbf16, #tpu.memory_space<vmem>>, %arg7: memref<32x32xbf16, #tpu.memory_space<vmem>>, %arg8: memref<1x32xf32, #tpu.memory_space<vmem>>, %arg9: memref<1x32xf32, #tpu.memory_space<vmem>>, %arg10: memref<32x64xbf16, #tpu.memory_space<vmem>>, %arg11: memref<1x64xf32, #tpu.memory_space<vmem>>, %arg12: memref<64x32xbf16, #tpu.memory_space<vmem>>, %arg13: memref<1x32xf32, #tpu.memory_space<vmem>>, %arg14: memref<1x32xf32, #tpu.memory_space<vmem>>, %arg15: memref<1x32xf32, #tpu.memory_space<vmem>>, %arg16: memref<1x8x32xf32, #tpu.memory_space<vmem>>, %arg17: memref<8x32xf32, #tpu.memory_space<vmem>>) attributes {dimension_semantics = [#tpu.dimension_semantics<parallel>], iteration_bounds = array<i64: 2>, scalar_prefetch = 0 : i64, scratch_operands = 1 : i64, tpu.core_type = #tpu.core_type<tc>, window_params = [{transform_indices = @transform_0, window_bounds = array<i64: 1, 8, 32>}, {transform_indices = @transform_1, window_bounds = array<i64: 1, 8, 32>}, {transform_indices = @transform_2, window_bounds = array<i64: 1, 8, 32>}, {pipeline_mode = #tpu.pipeline_mode<synchronous>, transform_indices = @transform_3, window_bounds = array<i64: 32, 32>}, {pipeline_mode = #tpu.pipeline_mode<synchronous>, transform_indices = @transform_4, window_bounds = array<i64: 32, 32>}, {pipeline_mode = #tpu.pipeline_mode<synchronous>, transform_indices = @transform_5, window_bounds = array<i64: 32, 32>}, {pipeline_mode = #tpu.pipeline_mode<synchronous>, transform_indices = @transform_6, window_bounds = array<i64: 32, 32>}, {pipeline_mode = #tpu.pipeline_mode<synchronous>, transform_indices = @transform_7, window_bounds = array<i64: 1, 32>}, {pipeline_mode = #tpu.pipeline_mode<synchronous>, transform_indices = @transform_8, window_bounds = array<i64: 1, 32>}, {pipeline_mode = #tpu.pipeline_mode<synchronous>, transform_indices = @transform_9, window_bounds = array<i64: 32, 64>}, {pipeline_mode = #tpu.pipeline_mode<synchronous>, transform_indices = @transform_10, window_bounds = array<i64: 1, 64>}, {pipeline_mode = #tpu.pipeline_mode<synchronous>, transform_indices = @transform_11, window_bounds = array<i64: 64, 32>}, {pipeline_mode = #tpu.pipeline_mode<synchronous>, transform_indices = @transform_12, window_bounds = array<i64: 1, 32>}, {pipeline_mode = #tpu.pipeline_mode<synchronous>, transform_indices = @transform_13, window_bounds = array<i64: 1, 32>}, {pipeline_mode = #tpu.pipeline_mode<synchronous>, transform_indices = @transform_14, window_bounds = array<i64: 1, 32>}, {transform_indices = @transform_15, window_bounds = array<i64: 1, 8, 32>}]} {
    %c0 = arith.constant 0 : index
    %c0_0 = arith.constant 0 : index
    %c0_1 = arith.constant 0 : index
    %0 = vector.load %arg1[%c0, %c0_0, %c0_1] : memref<1x8x32xbf16, #tpu.memory_space<vmem>>, vector<1x8x32xbf16>
    %1 = vector.shape_cast %0 : vector<1x8x32xbf16> to vector<8x32xbf16>
    %c0_2 = arith.constant 0 : index
    %c0_3 = arith.constant 0 : index
    %c0_4 = arith.constant 0 : index
    %2 = vector.load %arg2[%c0_2, %c0_3, %c0_4] : memref<1x8x32xbf16, #tpu.memory_space<vmem>>, vector<1x8x32xbf16>
    %3 = vector.shape_cast %2 : vector<1x8x32xbf16> to vector<8x32xbf16>
    %c0_5 = arith.constant 0 : index
    %c0_6 = arith.constant 0 : index
    %c0_7 = arith.constant 0 : index
    %4 = vector.load %arg3[%c0_5, %c0_6, %c0_7] : memref<1x8x32xbf16, #tpu.memory_space<vmem>>, vector<1x8x32xbf16>
    %5 = vector.shape_cast %4 : vector<1x8x32xbf16> to vector<8x32xbf16>
    %c0_8 = arith.constant 0 : index
    %c0_9 = arith.constant 0 : index
    %6 = vector.load %arg4[%c0_8, %c0_9] : memref<32x32xbf16, #tpu.memory_space<vmem>>, vector<32x32xbf16>
    %cst = arith.constant dense<0.000000e+00> : vector<8x32xf32>
    %7 = tpu.matmul %1, %6, %cst {dimension_numbers = #tpu.dot_dimension_numbers<[1], [0], [0], [1], [0, 0, 1, 1], [], []>} : vector<8x32xbf16>, vector<32x32xbf16>, vector<8x32xf32> -> vector<8x32xf32>
    %cst_10 = arith.constant 0.353553385 : f32
    %8 = vector.broadcast %cst_10 : f32 to vector<8x32xf32>
    %9 = arith.mulf %7, %8 : vector<8x32xf32>
    %c0_11 = arith.constant 0 : index
    %c0_12 = arith.constant 0 : index
    %10 = vector.load %arg5[%c0_11, %c0_12] : memref<32x32xbf16, #tpu.memory_space<vmem>>, vector<32x32xbf16>
    %cst_13 = arith.constant dense<0.000000e+00> : vector<8x32xf32>
    %11 = tpu.matmul %3, %10, %cst_13 {dimension_numbers = #tpu.dot_dimension_numbers<[1], [0], [0], [1], [0, 0, 1, 1], [], []>} : vector<8x32xbf16>, vector<32x32xbf16>, vector<8x32xf32> -> vector<8x32xf32>
    %c0_14 = arith.constant 0 : index
    %c0_15 = arith.constant 0 : index
    %12 = vector.load %arg6[%c0_14, %c0_15] : memref<32x32xbf16, #tpu.memory_space<vmem>>, vector<32x32xbf16>
    %cst_16 = arith.constant dense<0.000000e+00> : vector<8x32xf32>
    %13 = tpu.matmul %5, %12, %cst_16 {dimension_numbers = #tpu.dot_dimension_numbers<[1], [0], [0], [1], [0, 0, 1, 1], [], []>} : vector<8x32xbf16>, vector<32x32xbf16>, vector<8x32xf32> -> vector<8x32xf32>
    %14 = vector.shape_cast %9 : vector<8x32xf32> to vector<1x8x32xf32>
    %15 = vector.shape_cast %11 : vector<8x32xf32> to vector<1x8x32xf32>
    %16 = vector.shape_cast %13 : vector<8x32xf32> to vector<1x8x32xf32>
    %17 = vector.extract_strided_slice %14 {offsets = [0, 0, 0], sizes = [1, 8, 8], strides = [1, 1, 1]} : vector<1x8x32xf32> to vector<1x8x8xf32>
    %18 = vector.extract_strided_slice %15 {offsets = [0, 0, 0], sizes = [1, 8, 8], strides = [1, 1, 1]} : vector<1x8x32xf32> to vector<1x8x8xf32>
    %19 = vector.extract_strided_slice %16 {offsets = [0, 0, 0], sizes = [1, 8, 8], strides = [1, 1, 1]} : vector<1x8x32xf32> to vector<1x8x8xf32>
    "tpu.trace_start"() <{level = 10 : i32, message = "bqe,bke->bqk"}> : () -> ()
    %cst_17 = arith.constant dense<0.000000e+00> : vector<1x8x8xf32>
    %20 = tpu.matmul %17, %18, %cst_17 {dimension_numbers = #tpu.dot_dimension_numbers<[2], [2], [1], [1], [0, 0, 0, 1, 1, 1], [0], [0]>} : vector<1x8x8xf32>, vector<1x8x8xf32>, vector<1x8x8xf32> -> vector<1x8x8xf32>
    "tpu.trace_stop"() : () -> ()
    %cst_18 = arith.constant dense<0xFF800000> : vector<1x8xf32>
    %21 = vector.multi_reduction <maximumf>, %20, %cst_18 [2] : vector<1x8x8xf32> to vector<1x8xf32>
    %22 = vector.shape_cast %21 : vector<1x8xf32> to vector<1x8x1xf32>
    %23 = vector.broadcast %22 : vector<1x8x1xf32> to vector<1x8x8xf32>
    %24 = arith.subf %20, %23 : vector<1x8x8xf32>
    %25 = math.exp %24 : vector<1x8x8xf32>
    %cst_19 = arith.constant dense<0.000000e+00> : vector<1x8xf32>
    %26 = vector.multi_reduction <add>, %25, %cst_19 [2] : vector<1x8x8xf32> to vector<1x8xf32>
    %27 = vector.shape_cast %26 : vector<1x8xf32> to vector<1x8x1xf32>
    "tpu.trace_start"() <{level = 10 : i32, message = "bqk,bke->bqe"}> : () -> ()
    %cst_20 = arith.constant dense<0.000000e+00> : vector<1x8x8xf32>
    %28 = tpu.matmul %25, %19, %cst_20 {dimension_numbers = #tpu.dot_dimension_numbers<[2], [1], [1], [2], [0, 0, 0, 1, 1, 2], [0], [0]>} : vector<1x8x8xf32>, vector<1x8x8xf32>, vector<1x8x8xf32> -> vector<1x8x8xf32>
    "tpu.trace_stop"() : () -> ()
    %29 = tpu.reciprocal %27 {approx = true} : vector<1x8x1xf32> -> vector<1x8x1xf32>
    %30 = vector.broadcast %29 : vector<1x8x1xf32> to vector<1x8x8xf32>
    %31 = arith.mulf %28, %30 : vector<1x8x8xf32>
    %32 = vector.shape_cast %31 : vector<1x8x8xf32> to vector<8x8xf32>
    %c0_21 = arith.constant 0 : index
    %c0_22 = arith.constant 0 : index
    %33 = vector.load %arg17[%c0_21, %c0_22] : memref<8x32xf32, #tpu.memory_space<vmem>>, vector<8x8xf32>
    tpu.vector_store %arg17[%c0_21, %c0_22], %32 {strides = array<i32>} : memref<8x32xf32, #tpu.memory_space<vmem>>, vector<8x8xf32>,
    %34 = vector.extract_strided_slice %14 {offsets = [0, 0, 8], sizes = [1, 8, 8], strides = [1, 1, 1]} : vector<1x8x32xf32> to vector<1x8x8xf32>
    %35 = vector.extract_strided_slice %15 {offsets = [0, 0, 8], sizes = [1, 8, 8], strides = [1, 1, 1]} : vector<1x8x32xf32> to vector<1x8x8xf32>
    %36 = vector.extract_strided_slice %16 {offsets = [0, 0, 8], sizes = [1, 8, 8], strides = [1, 1, 1]} : vector<1x8x32xf32> to vector<1x8x8xf32>
    "tpu.trace_start"() <{level = 10 : i32, message = "bqe,bke->bqk"}> : () -> ()
    %cst_23 = arith.constant dense<0.000000e+00> : vector<1x8x8xf32>
    %37 = tpu.matmul %34, %35, %cst_23 {dimension_numbers = #tpu.dot_dimension_numbers<[2], [2], [1], [1], [0, 0, 0, 1, 1, 1], [0], [0]>} : vector<1x8x8xf32>, vector<1x8x8xf32>, vector<1x8x8xf32> -> vector<1x8x8xf32>
    "tpu.trace_stop"() : () -> ()
    %cst_24 = arith.constant dense<0xFF800000> : vector<1x8xf32>
    %38 = vector.multi_reduction <maximumf>, %37, %cst_24 [2] : vector<1x8x8xf32> to vector<1x8xf32>
    %39 = vector.shape_cast %38 : vector<1x8xf32> to vector<1x8x1xf32>
    %40 = vector.broadcast %39 : vector<1x8x1xf32> to vector<1x8x8xf32>
    %41 = arith.subf %37, %40 : vector<1x8x8xf32>
    %42 = math.exp %41 : vector<1x8x8xf32>
    %cst_25 = arith.constant dense<0.000000e+00> : vector<1x8xf32>
    %43 = vector.multi_reduction <add>, %42, %cst_25 [2] : vector<1x8x8xf32> to vector<1x8xf32>
    %44 = vector.shape_cast %43 : vector<1x8xf32> to vector<1x8x1xf32>
    "tpu.trace_start"() <{level = 10 : i32, message = "bqk,bke->bqe"}> : () -> ()
    %cst_26 = arith.constant dense<0.000000e+00> : vector<1x8x8xf32>
    %45 = tpu.matmul %42, %36, %cst_26 {dimension_numbers = #tpu.dot_dimension_numbers<[2], [1], [1], [2], [0, 0, 0, 1, 1, 2], [0], [0]>} : vector<1x8x8xf32>, vector<1x8x8xf32>, vector<1x8x8xf32> -> vector<1x8x8xf32>
    "tpu.trace_stop"() : () -> ()
    %46 = tpu.reciprocal %44 {approx = true} : vector<1x8x1xf32> -> vector<1x8x1xf32>
    %47 = vector.broadcast %46 : vector<1x8x1xf32> to vector<1x8x8xf32>
    %48 = arith.mulf %45, %47 : vector<1x8x8xf32>
    %49 = vector.shape_cast %48 : vector<1x8x8xf32> to vector<8x8xf32>
    %c0_27 = arith.constant 0 : index
    %c8 = arith.constant 8 : index
    %50 = vector.load %arg17[%c0_27, %c8] : memref<8x32xf32, #tpu.memory_space<vmem>>, vector<8x8xf32>
    tpu.vector_store %arg17[%c0_27, %c8], %49 {strides = array<i32>} : memref<8x32xf32, #tpu.memory_space<vmem>>, vector<8x8xf32>,
    %51 = vector.extract_strided_slice %14 {offsets = [0, 0, 16], sizes = [1, 8, 8], strides = [1, 1, 1]} : vector<1x8x32xf32> to vector<1x8x8xf32>
    %52 = vector.extract_strided_slice %15 {offsets = [0, 0, 16], sizes = [1, 8, 8], strides = [1, 1, 1]} : vector<1x8x32xf32> to vector<1x8x8xf32>
    %53 = vector.extract_strided_slice %16 {offsets = [0, 0, 16], sizes = [1, 8, 8], strides = [1, 1, 1]} : vector<1x8x32xf32> to vector<1x8x8xf32>
    "tpu.trace_start"() <{level = 10 : i32, message = "bqe,bke->bqk"}> : () -> ()
    %cst_28 = arith.constant dense<0.000000e+00> : vector<1x8x8xf32>
    %54 = tpu.matmul %51, %52, %cst_28 {dimension_numbers = #tpu.dot_dimension_numbers<[2], [2], [1], [1], [0, 0, 0, 1, 1, 1], [0], [0]>} : vector<1x8x8xf32>, vector<1x8x8xf32>, vector<1x8x8xf32> -> vector<1x8x8xf32>
    "tpu.trace_stop"() : () -> ()
    %cst_29 = arith.constant dense<0xFF800000> : vector<1x8xf32>
    %55 = vector.multi_reduction <maximumf>, %54, %cst_29 [2] : vector<1x8x8xf32> to vector<1x8xf32>
    %56 = vector.shape_cast %55 : vector<1x8xf32> to vector<1x8x1xf32>
    %57 = vector.broadcast %56 : vector<1x8x1xf32> to vector<1x8x8xf32>
    %58 = arith.subf %54, %57 : vector<1x8x8xf32>
    %59 = math.exp %58 : vector<1x8x8xf32>
    %cst_30 = arith.constant dense<0.000000e+00> : vector<1x8xf32>
    %60 = vector.multi_reduction <add>, %59, %cst_30 [2] : vector<1x8x8xf32> to vector<1x8xf32>
    %61 = vector.shape_cast %60 : vector<1x8xf32> to vector<1x8x1xf32>
    "tpu.trace_start"() <{level = 10 : i32, message = "bqk,bke->bqe"}> : () -> ()
    %cst_31 = arith.constant dense<0.000000e+00> : vector<1x8x8xf32>
    %62 = tpu.matmul %59, %53, %cst_31 {dimension_numbers = #tpu.dot_dimension_numbers<[2], [1], [1], [2], [0, 0, 0, 1, 1, 2], [0], [0]>} : vector<1x8x8xf32>, vector<1x8x8xf32>, vector<1x8x8xf32> -> vector<1x8x8xf32>
    "tpu.trace_stop"() : () -> ()
    %63 = tpu.reciprocal %61 {approx = true} : vector<1x8x1xf32> -> vector<1x8x1xf32>
    %64 = vector.broadcast %63 : vector<1x8x1xf32> to vector<1x8x8xf32>
    %65 = arith.mulf %62, %64 : vector<1x8x8xf32>
    %66 = vector.shape_cast %65 : vector<1x8x8xf32> to vector<8x8xf32>
    %c0_32 = arith.constant 0 : index
    %c16 = arith.constant 16 : index
    %67 = vector.load %arg17[%c0_32, %c16] : memref<8x32xf32, #tpu.memory_space<vmem>>, vector<8x8xf32>
    tpu.vector_store %arg17[%c0_32, %c16], %66 {strides = array<i32>} : memref<8x32xf32, #tpu.memory_space<vmem>>, vector<8x8xf32>,
    %68 = vector.extract_strided_slice %14 {offsets = [0, 0, 24], sizes = [1, 8, 8], strides = [1, 1, 1]} : vector<1x8x32xf32> to vector<1x8x8xf32>
    %69 = vector.extract_strided_slice %15 {offsets = [0, 0, 24], sizes = [1, 8, 8], strides = [1, 1, 1]} : vector<1x8x32xf32> to vector<1x8x8xf32>
    %70 = vector.extract_strided_slice %16 {offsets = [0, 0, 24], sizes = [1, 8, 8], strides = [1, 1, 1]} : vector<1x8x32xf32> to vector<1x8x8xf32>
    "tpu.trace_start"() <{level = 10 : i32, message = "bqe,bke->bqk"}> : () -> ()
    %cst_33 = arith.constant dense<0.000000e+00> : vector<1x8x8xf32>
    %71 = tpu.matmul %68, %69, %cst_33 {dimension_numbers = #tpu.dot_dimension_numbers<[2], [2], [1], [1], [0, 0, 0, 1, 1, 1], [0], [0]>} : vector<1x8x8xf32>, vector<1x8x8xf32>, vector<1x8x8xf32> -> vector<1x8x8xf32>
    "tpu.trace_stop"() : () -> ()
    %cst_34 = arith.constant dense<0xFF800000> : vector<1x8xf32>
    %72 = vector.multi_reduction <maximumf>, %71, %cst_34 [2] : vector<1x8x8xf32> to vector<1x8xf32>
    %73 = vector.shape_cast %72 : vector<1x8xf32> to vector<1x8x1xf32>
    %74 = vector.broadcast %73 : vector<1x8x1xf32> to vector<1x8x8xf32>
    %75 = arith.subf %71, %74 : vector<1x8x8xf32>
    %76 = math.exp %75 : vector<1x8x8xf32>
    %cst_35 = arith.constant dense<0.000000e+00> : vector<1x8xf32>
    %77 = vector.multi_reduction <add>, %76, %cst_35 [2] : vector<1x8x8xf32> to vector<1x8xf32>
    %78 = vector.shape_cast %77 : vector<1x8xf32> to vector<1x8x1xf32>
    "tpu.trace_start"() <{level = 10 : i32, message = "bqk,bke->bqe"}> : () -> ()
    %cst_36 = arith.constant dense<0.000000e+00> : vector<1x8x8xf32>
    %79 = tpu.matmul %76, %70, %cst_36 {dimension_numbers = #tpu.dot_dimension_numbers<[2], [1], [1], [2], [0, 0, 0, 1, 1, 2], [0], [0]>} : vector<1x8x8xf32>, vector<1x8x8xf32>, vector<1x8x8xf32> -> vector<1x8x8xf32>
    "tpu.trace_stop"() : () -> ()
    %80 = tpu.reciprocal %78 {approx = true} : vector<1x8x1xf32> -> vector<1x8x1xf32>
    %81 = vector.broadcast %80 : vector<1x8x1xf32> to vector<1x8x8xf32>
    %82 = arith.mulf %79, %81 : vector<1x8x8xf32>
    %83 = vector.shape_cast %82 : vector<1x8x8xf32> to vector<8x8xf32>
    %c0_37 = arith.constant 0 : index
    %c24 = arith.constant 24 : index
    %84 = vector.load %arg17[%c0_37, %c24] : memref<8x32xf32, #tpu.memory_space<vmem>>, vector<8x8xf32>
    tpu.vector_store %arg17[%c0_37, %c24], %83 {strides = array<i32>} : memref<8x32xf32, #tpu.memory_space<vmem>>, vector<8x8xf32>,
    %c0_38 = arith.constant 0 : index
    %c0_39 = arith.constant 0 : index
    %85 = vector.load %arg17[%c0_38, %c0_39] : memref<8x32xf32, #tpu.memory_space<vmem>>, vector<8x32xf32>
    %86 = arith.truncf %85 : vector<8x32xf32> to vector<8x32xbf16>
    %c0_40 = arith.constant 0 : index
    %c0_41 = arith.constant 0 : index
    %87 = vector.load %arg7[%c0_40, %c0_41] : memref<32x32xbf16, #tpu.memory_space<vmem>>, vector<32x32xbf16>
    %cst_42 = arith.constant dense<0.000000e+00> : vector<8x32xf32>
    %88 = tpu.matmul %86, %87, %cst_42 {dimension_numbers = #tpu.dot_dimension_numbers<[1], [0], [0], [1], [0, 0, 1, 1], [], []>} : vector<8x32xbf16>, vector<32x32xbf16>, vector<8x32xf32> -> vector<8x32xf32>
    %89 = arith.extf %1 : vector<8x32xbf16> to vector<8x32xf32>
    %90 = arith.addf %89, %88 : vector<8x32xf32>
    %c0_43 = arith.constant 0 : index
    %c0_44 = arith.constant 0 : index
    %91 = vector.load %arg8[%c0_43, %c0_44] : memref<1x32xf32, #tpu.memory_space<vmem>>, vector<1x32xf32>
    %c0_45 = arith.constant 0 : index
    %c0_46 = arith.constant 0 : index
    %92 = vector.load %arg9[%c0_45, %c0_46] : memref<1x32xf32, #tpu.memory_space<vmem>>, vector<1x32xf32>
    %cst_47 = arith.constant dense<0.000000e+00> : vector<8xf32>
    %93 = vector.multi_reduction <add>, %90, %cst_47 [1] : vector<8x32xf32> to vector<8xf32>
    %94 = vector.shape_cast %93 : vector<8xf32> to vector<8x1xf32>
    %cst_48 = arith.constant 3.200000e+01 : f32
    %95 = vector.broadcast %cst_48 : f32 to vector<8x1xf32>
    %96 = arith.divf %94, %95 : vector<8x1xf32>
    %97 = vector.broadcast %96 : vector<8x1xf32> to vector<8x32xf32>
    %98 = arith.subf %90, %97 : vector<8x32xf32>
    %99 = arith.mulf %98, %98 : vector<8x32xf32>
    %cst_49 = arith.constant dense<0.000000e+00> : vector<8xf32>
    %100 = vector.multi_reduction <add>, %99, %cst_49 [1] : vector<8x32xf32> to vector<8xf32>
    %101 = vector.shape_cast %100 : vector<8xf32> to vector<8x1xf32>
    %cst_50 = arith.constant 3.200000e+01 : f32
    %102 = vector.broadcast %cst_50 : f32 to vector<8x1xf32>
    %103 = arith.divf %101, %102 : vector<8x1xf32>
    %104 = vector.broadcast %96 : vector<8x1xf32> to vector<8x32xf32>
    %105 = arith.subf %90, %104 : vector<8x32xf32>
    %cst_51 = arith.constant 9.99999974E-6 : f32
    %106 = vector.broadcast %cst_51 : f32 to vector<8x1xf32>
    %107 = arith.addf %103, %106 : vector<8x1xf32>
    %108 = math.rsqrt %107 : vector<8x1xf32>
    %109 = vector.broadcast %108 : vector<8x1xf32> to vector<8x32xf32>
    %110 = arith.mulf %105, %109 : vector<8x32xf32>
    %111 = vector.broadcast %91 : vector<1x32xf32> to vector<8x32xf32>
    %112 = arith.mulf %110, %111 : vector<8x32xf32>
    %113 = vector.broadcast %92 : vector<1x32xf32> to vector<8x32xf32>
    %114 = arith.addf %112, %113 : vector<8x32xf32>
    %115 = arith.truncf %114 : vector<8x32xf32> to vector<8x32xbf16>
    %c0_52 = arith.constant 0 : index
    %c0_53 = arith.constant 0 : index
    %116 = vector.load %arg10[%c0_52, %c0_53] : memref<32x64xbf16, #tpu.memory_space<vmem>>, vector<32x64xbf16>
    %cst_54 = arith.constant dense<0.000000e+00> : vector<8x64xf32>
    %117 = tpu.matmul %115, %116, %cst_54 {dimension_numbers = #tpu.dot_dimension_numbers<[1], [0], [0], [1], [0, 0, 1, 1], [], []>} : vector<8x32xbf16>, vector<32x64xbf16>, vector<8x64xf32> -> vector<8x64xf32>
    %c0_55 = arith.constant 0 : index
    %c0_56 = arith.constant 0 : index
    %118 = vector.load %arg11[%c0_55, %c0_56] : memref<1x64xf32, #tpu.memory_space<vmem>>, vector<1x64xf32>
    %119 = vector.broadcast %118 : vector<1x64xf32> to vector<8x64xf32>
    %120 = arith.addf %117, %119 : vector<8x64xf32>
    %cst_57 = arith.constant 0.000000e+00 : f32
    %121 = vector.broadcast %cst_57 : f32 to vector<8x64xf32>
    %122 = arith.maximumf %120, %121 : vector<8x64xf32>
    %123 = arith.truncf %122 : vector<8x64xf32> to vector<8x64xbf16>
    %c0_58 = arith.constant 0 : index
    %c0_59 = arith.constant 0 : index
    %124 = vector.load %arg12[%c0_58, %c0_59] : memref<64x32xbf16, #tpu.memory_space<vmem>>, vector<64x32xbf16>
    %cst_60 = arith.constant dense<0.000000e+00> : vector<8x32xf32>
    %125 = tpu.matmul %123, %124, %cst_60 {dimension_numbers = #tpu.dot_dimension_numbers<[1], [0], [0], [1], [0, 0, 1, 1], [], []>} : vector<8x64xbf16>, vector<64x32xbf16>, vector<8x32xf32> -> vector<8x32xf32>
    %c0_61 = arith.constant 0 : index
    %c0_62 = arith.constant 0 : index
    %126 = vector.load %arg13[%c0_61, %c0_62] : memref<1x32xf32, #tpu.memory_space<vmem>>, vector<1x32xf32>
    %127 = vector.broadcast %126 : vector<1x32xf32> to vector<8x32xf32>
    %128 = arith.addf %125, %127 : vector<8x32xf32>
    %129 = arith.addf %114, %128 : vector<8x32xf32>
    %c0_63 = arith.constant 0 : index
    %c0_64 = arith.constant 0 : index
    %130 = vector.load %arg14[%c0_63, %c0_64] : memref<1x32xf32, #tpu.memory_space<vmem>>, vector<1x32xf32>
    %c0_65 = arith.constant 0 : index
    %c0_66 = arith.constant 0 : index
    %131 = vector.load %arg15[%c0_65, %c0_66] : memref<1x32xf32, #tpu.memory_space<vmem>>, vector<1x32xf32>
    %cst_67 = arith.constant dense<0.000000e+00> : vector<8xf32>
    %132 = vector.multi_reduction <add>, %129, %cst_67 [1] : vector<8x32xf32> to vector<8xf32>
    %133 = vector.shape_cast %132 : vector<8xf32> to vector<8x1xf32>
    %cst_68 = arith.constant 3.200000e+01 : f32
    %134 = vector.broadcast %cst_68 : f32 to vector<8x1xf32>
    %135 = arith.divf %133, %134 : vector<8x1xf32>
    %136 = vector.broadcast %135 : vector<8x1xf32> to vector<8x32xf32>
    %137 = arith.subf %129, %136 : vector<8x32xf32>
    %138 = arith.mulf %137, %137 : vector<8x32xf32>
    %cst_69 = arith.constant dense<0.000000e+00> : vector<8xf32>
    %139 = vector.multi_reduction <add>, %138, %cst_69 [1] : vector<8x32xf32> to vector<8xf32>
    %140 = vector.shape_cast %139 : vector<8xf32> to vector<8x1xf32>
    %cst_70 = arith.constant 3.200000e+01 : f32
    %141 = vector.broadcast %cst_70 : f32 to vector<8x1xf32>
    %142 = arith.divf %140, %141 : vector<8x1xf32>
    %143 = vector.broadcast %135 : vector<8x1xf32> to vector<8x32xf32>
    %144 = arith.subf %129, %143 : vector<8x32xf32>
    %cst_71 = arith.constant 9.99999974E-6 : f32
    %145 = vector.broadcast %cst_71 : f32 to vector<8x1xf32>
    %146 = arith.addf %142, %145 : vector<8x1xf32>
    %147 = math.rsqrt %146 : vector<8x1xf32>
    %148 = vector.broadcast %147 : vector<8x1xf32> to vector<8x32xf32>
    %149 = arith.mulf %144, %148 : vector<8x32xf32>
    %150 = vector.broadcast %130 : vector<1x32xf32> to vector<8x32xf32>
    %151 = arith.mulf %149, %150 : vector<8x32xf32>
    %152 = vector.broadcast %131 : vector<1x32xf32> to vector<8x32xf32>
    %153 = arith.addf %151, %152 : vector<8x32xf32>
    %154 = vector.shape_cast %153 : vector<8x32xf32> to vector<1x8x32xf32>
    %c0_72 = arith.constant 0 : index
    %c0_73 = arith.constant 0 : index
    %c0_74 = arith.constant 0 : index
    %155 = vector.load %arg16[%c0_72, %c0_73, %c0_74] : memref<1x8x32xf32, #tpu.memory_space<vmem>>, vector<1x8x32xf32>
    tpu.vector_store %arg16[%c0_72, %c0_73, %c0_74], %154 {strides = array<i32>} : memref<1x8x32xf32, #tpu.memory_space<vmem>>, vector<1x8x32xf32>,
    return
  }
  func.func @transform_0(%arg0: i32) -> (i32, i32, i32) {
    %c0_i32 = arith.constant 0 : i32
    %c0_i32_0 = arith.constant 0 : i32
    %c0_i32_1 = arith.constant 0 : i32
    return %arg0, %c0_i32, %c0_i32_0 : i32, i32, i32
  }
  func.func @transform_1(%arg0: i32) -> (i32, i32, i32) {
    %c0_i32 = arith.constant 0 : i32
    %c0_i32_0 = arith.constant 0 : i32
    %c0_i32_1 = arith.constant 0 : i32
    return %arg0, %c0_i32, %c0_i32_0 : i32, i32, i32
  }
  func.func @transform_2(%arg0: i32) -> (i32, i32, i32) {
    %c0_i32 = arith.constant 0 : i32
    %c0_i32_0 = arith.constant 0 : i32
    %c0_i32_1 = arith.constant 0 : i32
    return %arg0, %c0_i32, %c0_i32_0 : i32, i32, i32
  }
  func.func @transform_3(%arg0: i32) -> (i32, i32) {
    %c0_i32 = arith.constant 0 : i32
    %c0_i32_0 = arith.constant 0 : i32
    %c0_i32_1 = arith.constant 0 : i32
    return %c0_i32, %c0_i32_0 : i32, i32
  }
  func.func @transform_4(%arg0: i32) -> (i32, i32) {
    %c0_i32 = arith.constant 0 : i32
    %c0_i32_0 = arith.constant 0 : i32
    %c0_i32_1 = arith.constant 0 : i32
    return %c0_i32, %c0_i32_0 : i32, i32
  }
  func.func @transform_5(%arg0: i32) -> (i32, i32) {
    %c0_i32 = arith.constant 0 : i32
    %c0_i32_0 = arith.constant 0 : i32
    %c0_i32_1 = arith.constant 0 : i32
    return %c0_i32, %c0_i32_0 : i32, i32
  }
  func.func @transform_6(%arg0: i32) -> (i32, i32) {
    %c0_i32 = arith.constant 0 : i32
    %c0_i32_0 = arith.constant 0 : i32
    %c0_i32_1 = arith.constant 0 : i32
    return %c0_i32, %c0_i32_0 : i32, i32
  }
  func.func @transform_7(%arg0: i32) -> (i32, i32) {
    %c0_i32 = arith.constant 0 : i32
    %c0_i32_0 = arith.constant 0 : i32
    %c0_i32_1 = arith.constant 0 : i32
    return %c0_i32, %c0_i32_0 : i32, i32
  }
  func.func @transform_8(%arg0: i32) -> (i32, i32) {
    %c0_i32 = arith.constant 0 : i32
    %c0_i32_0 = arith.constant 0 : i32
    %c0_i32_1 = arith.constant 0 : i32
    return %c0_i32, %c0_i32_0 : i32, i32
  }
  func.func @transform_9(%arg0: i32) -> (i32, i32) {
    %c0_i32 = arith.constant 0 : i32
    %c0_i32_0 = arith.constant 0 : i32
    %c0_i32_1 = arith.constant 0 : i32
    return %c0_i32, %c0_i32_0 : i32, i32
  }
  func.func @transform_10(%arg0: i32) -> (i32, i32) {
    %c0_i32 = arith.constant 0 : i32
    %c0_i32_0 = arith.constant 0 : i32
    %c0_i32_1 = arith.constant 0 : i32
    return %c0_i32, %c0_i32_0 : i32, i32
  }
  func.func @transform_11(%arg0: i32) -> (i32, i32) {
    %c0_i32 = arith.constant 0 : i32
    %c0_i32_0 = arith.constant 0 : i32
    %c0_i32_1 = arith.constant 0 : i32
    return %c0_i32, %c0_i32_0 : i32, i32
  }
  func.func @transform_12(%arg0: i32) -> (i32, i32) {
    %c0_i32 = arith.constant 0 : i32
    %c0_i32_0 = arith.constant 0 : i32
    %c0_i32_1 = arith.constant 0 : i32
    return %c0_i32, %c0_i32_0 : i32, i32
  }
  func.func @transform_13(%arg0: i32) -> (i32, i32) {
    %c0_i32 = arith.constant 0 : i32
    %c0_i32_0 = arith.constant 0 : i32
    %c0_i32_1 = arith.constant 0 : i32
    return %c0_i32, %c0_i32_0 : i32, i32
  }
  func.func @transform_14(%arg0: i32) -> (i32, i32) {
    %c0_i32 = arith.constant 0 : i32
    %c0_i32_0 = arith.constant 0 : i32
    %c0_i32_1 = arith.constant 0 : i32
    return %c0_i32, %c0_i32_0 : i32, i32
  }
  func.func @transform_15(%arg0: i32) -> (i32, i32, i32) {
    %c0_i32 = arith.constant 0 : i32
    %c0_i32_0 = arith.constant 0 : i32
    %c0_i32_1 = arith.constant 0 : i32
    return %arg0, %c0_i32, %c0_i32_0 : i32, i32, i32
  }
}

</mosaic_0001>

<llo_original>
// kernel: tpu_custom_call.1
$region0: #{tpu_custom_call.1}
  #allocation0 [shape = 'u32[]', space=smem, size = 0x4, offset = 0x4, fixed_abs, tag = 'smem constant byte address 0x4 - core index']
  #allocation1 [shape = 'u32[144,128]{1,0:T(1,128)}', space=vmem, size = 0x12000, scoped, tag = 'internal scratch']
  #allocation2 [shape = 'f32[8,32]{1,0:T(8,128)}', space=vmem, size = 0x1000, scoped, tag = 'scratch operand']
  %s0 = inlined_call_operand.hbm [shape: bf16[2,8,32], index: 0, kind: input, shape index: {}]
  %s1 = inlined_call_operand.hbm [shape: bf16[2,8,32], index: 1, kind: input, shape index: {}]
  %s2 = inlined_call_operand.hbm [shape: bf16[2,8,32], index: 2, kind: input, shape index: {}]
  %s3 = inlined_call_operand.vmem [shape: bf16[32,32], index: 3, kind: input, shape index: {}]
  %s4 = inlined_call_operand.vmem [shape: bf16[32,32], index: 4, kind: input, shape index: {}]
  %s5 = inlined_call_operand.vmem [shape: bf16[32,32], index: 5, kind: input, shape index: {}]
  %s6 = inlined_call_operand.hbm [shape: bf16[32,32], index: 6, kind: input, shape index: {}]
  %s7 = inlined_call_operand.hbm [shape: f32[1,32], index: 7, kind: input, shape index: {}]
  %s8 = inlined_call_operand.hbm [shape: f32[1,32], index: 8, kind: input, shape index: {}]
  %s9 = inlined_call_operand.vmem [shape: bf16[32,64], index: 9, kind: input, shape index: {}]
  %s10 = inlined_call_operand.vmem [shape: f32[1,64], index: 10, kind: input, shape index: {}]
  %s11 = inlined_call_operand.vmem [shape: bf16[64,32], index: 11, kind: input, shape index: {}]
  %s12 = inlined_call_operand.vmem [shape: f32[1,32], index: 12, kind: input, shape index: {}]
  %s13 = inlined_call_operand.vmem [shape: f32[1,32], index: 13, kind: input, shape index: {}]
  %s14 = inlined_call_operand.vmem [shape: f32[1,32], index: 14, kind: input, shape index: {}]
  %s15 = inlined_call_operand.hbm [shape: f32[2,8,32], index: 15, kind: output, shape index: {}]
  %s16 = sld [smem:[#allocation0]]
  $region117: #{tpu_custom_call.1} parent=0
    _
  %s18 = ssub.s32 1, %s16
  %s19 = scalar_select 0, %s18, %s16
  $region1: #{tpu_custom_call.1} parent=0
    #allocation3 [shape = 'u8[4096]{0}', space=vmem, size = 0x1000, scoped, tag = 'input window, operand 0']
    #allocation4 [shape = 's32[2]{0}', space=sflag, size = 0x8, scoped, tag = 'scoped memory for tpu_custom_call.1']
    #allocation5 [shape = 's32[2]{0}', space=sflag, size = 0x8, scoped, tag = 'scoped memory for tpu_custom_call.1']
    #allocation6 [shape = 'u8[4096]{0}', space=vmem, size = 0x1000, scoped, tag = 'input window, operand 1']
    #allocation7 [shape = 's32[2]{0}', space=sflag, size = 0x8, scoped, tag = 'scoped memory for tpu_custom_call.1']
    #allocation8 [shape = 'u8[4096]{0}', space=vmem, size = 0x1000, scoped, tag = 'input window, operand 2']
    #allocation9 [shape = 'u8[8192]{0}', space=vmem, size = 0x2000, scoped, tag = 'input window, operand 6, single buffered']
    #allocation10 [shape = 's32[1]{0}', space=sflag, size = 0x4, scoped, tag = 'scoped memory for tpu_custom_call.1']
    #allocation11 [shape = 'u8[512]{0}', space=vmem, size = 0x400, scoped, tag = 'input window, operand 7, single buffered']
    #allocation12 [shape = 'u8[512]{0}', space=vmem, size = 0x400, scoped, tag = 'input window, operand 8, single buffered']
    #allocation13 [shape = 's32[1]{0}', space=sflag, size = 0x4, scoped, tag = 'scoped memory for tpu_custom_call.1']
    #allocation14 [shape = 'u8[8192]{0}', space=vmem, size = 0x2000, scoped, tag = 'output window, operand 0']
    %20 = vsyncpa [#allocation4], 0
    %s21 = scalar_lea.sflag [#allocation4], 1
    %22 = vsyncpa %s21, 0
    %23 = vsyncpa [#allocation7], 0
    %s24 = scalar_lea.sflag [#allocation7], 1
    %25 = vsyncpa %s24, 0
    %26 = vsyncpa [#allocation10], 0
    %27 = vsyncpa [#allocation13], 0
    %28 = vsyncpa [#allocation5], 0
    %s29 = scalar_lea.sflag [#allocation5], 1
    %30 = vsyncpa %s29, 0
    loop: start=0, step=1, limit=4
    $region2: #{tpu_custom_call.1} parent=1 // loop_pre_header
      _
    $region3: #{tpu_custom_call.1} parent=1 // loop_header
      %s32 = sphi 0, %s36
      %p33 = scmp.ge.s32.totalorder %s32, 4
      %s42 = sphi 0, %s44
      %s45 = sphi 0, %s42
      %s46 = sphi 0, %s45
      %s62 = sphi 0, %s46
      %s68 = sphi 0, %s70
      %s71 = sphi 0, %s68
      %s72 = sphi 0, %s71
      %s88 = sphi 0, %s72
      %s94 = sphi 0, %s96
      %s97 = sphi 0, %s94
      %s98 = sphi 0, %s97
      %s114 = sphi 0, %s98
      %s118 = sphi 0, %s118
      %s120 = sphi 0, %s118
      %s121 = sphi 0, %s120
      %s135 = sphi 0, %s121
      %s139 = sphi 0, %s139
      %s141 = sphi 0, %s139
      %s142 = sphi 0, %s141
      %s156 = sphi 0, %s142
      %s160 = sphi 0, %s160
      %s162 = sphi 0, %s160
      %s163 = sphi 0, %s162
      %s177 = sphi 0, %s163
      %s181 = sphi 0, %s181
      %s183 = sphi 0, %s181
      %s184 = sphi 0, %s183
      %s198 = sphi 0, %s184
      %s202 = sphi 0, %s202
      %s204 = sphi 0, %s202
      %s205 = sphi 0, %s204
      %s219 = sphi 0, %s205
      %s223 = sphi 0, %s223
      %s225 = sphi 0, %s223
      %s226 = sphi 0, %s225
      %s240 = sphi 0, %s226
      %s244 = sphi 0, %s244
      %s246 = sphi 0, %s244
      %s247 = sphi 0, %s246
      %s261 = sphi 0, %s247
      %s265 = sphi 0, %s265
      %s267 = sphi 0, %s265
      %s268 = sphi 0, %s267
      %s282 = sphi 0, %s268
      %s286 = sphi 0, %s286
      %s288 = sphi 0, %s286
      %s289 = sphi 0, %s288
      %s303 = sphi 0, %s289
      %s307 = sphi 0, %s307
      %s309 = sphi 0, %s307
      %s310 = sphi 0, %s309
      %s324 = sphi 0, %s310
      %s328 = sphi 0, %s328
      %s330 = sphi 0, %s328
      %s331 = sphi 0, %s330
      %s345 = sphi 0, %s331
      %s349 = sphi 0, %s349
      %s351 = sphi 0, %s349
      %s352 = sphi 0, %s351
      %s366 = sphi 0, %s352
      %s372 = sphi 0, %s374
      %s375 = sphi 0, %s372
      %s376 = sphi 0, %s375
      %s392 = sphi 0, %s376
    $region4: #{tpu_custom_call.1} parent=1 // loop_header_branch
      %35 = sbr.rel (%p33) target = $region8
    $region5: #{tpu_custom_call.1} parent=1 // loop_body
      %s37 = ssub.s32 %s32, 1
      %s38 = ssub.s32 %s32, 2
      %s39 = sadd.s32 %s32, 1
      %s40 = ssub.s32 %s32, %s39
      %p41 = scmp.eq.s32.totalorder %s40, 0
      %s43 = sadd.s32 %s42, 1
      %s44 = scalar_select %p41, %s42, %s43
      %p47 = pneg %p41
      %p48 = scmp.eq.s32.totalorder %s32, 1
      %p49 = por %p47, %p48
      %p50 = scmp.ne.s32.totalorder %s42, %s45
      %p51 = scmp.eq.s32.totalorder %s32, 0
      %p52 = por %p50, %p51
      %p53 = scmp.ne.s32.totalorder %s42, %s45
      %p54 = scmp.eq.s32.totalorder %s37, 1
      %p55 = por %p53, %p54
      %p56 = scmp.ne.s32.totalorder %s45, %s46
      %p57 = scmp.eq.s32.totalorder %s37, 0
      %p58 = por %p56, %p57
      %p59 = scmp.ne.s32.totalorder %s45, %s46
      %p60 = scmp.eq.s32.totalorder %s38, 1
      %p61 = por %p59, %p60
      %p63 = scmp.ne.s32.totalorder %s46, %s62
      %p64 = scmp.eq.s32.totalorder %s38, 0
      %p65 = por %p63, %p64
      %s66 = ssub.s32 %s32, %s39
      %p67 = scmp.eq.s32.totalorder %s66, 0
      %s69 = sadd.s32 %s68, 1
      %s70 = scalar_select %p67, %s68, %s69
      %p73 = pneg %p67
      %p74 = scmp.eq.s32.totalorder %s32, 1
      %p75 = por %p73, %p74
      %p76 = scmp.ne.s32.totalorder %s68, %s71
      %p77 = scmp.eq.s32.totalorder %s32, 0
      %p78 = por %p76, %p77
      %p79 = scmp.ne.s32.totalorder %s68, %s71
      %p80 = scmp.eq.s32.totalorder %s37, 1
      %p81 = por %p79, %p80
      %p82 = scmp.ne.s32.totalorder %s71, %s72
      %p83 = scmp.eq.s32.totalorder %s37, 0
      %p84 = por %p82, %p83
      %p85 = scmp.ne.s32.totalorder %s71, %s72
      %p86 = scmp.eq.s32.totalorder %s38, 1
      %p87 = por %p85, %p86
      %p89 = scmp.ne.s32.totalorder %s72, %s88
      %p90 = scmp.eq.s32.totalorder %s38, 0
      %p91 = por %p89, %p90
      %s92 = ssub.s32 %s32, %s39
      %p93 = scmp.eq.s32.totalorder %s92, 0
      %s95 = sadd.s32 %s94, 1
      %s96 = scalar_select %p93, %s94, %s95
      %p99 = pneg %p93
      %p100 = scmp.eq.s32.totalorder %s32, 1
      %p101 = por %p99, %p100
      %p102 = scmp.ne.s32.totalorder %s94, %s97
      %p103 = scmp.eq.s32.totalorder %s32, 0
      %p104 = por %p102, %p103
      %p105 = scmp.ne.s32.totalorder %s94, %s97
      %p106 = scmp.eq.s32.totalorder %s37, 1
      %p107 = por %p105, %p106
      %p108 = scmp.ne.s32.totalorder %s97, %s98
      %p109 = scmp.eq.s32.totalorder %s37, 0
      %p110 = por %p108, %p109
      %p111 = scmp.ne.s32.totalorder %s97, %s98
      %p112 = scmp.eq.s32.totalorder %s38, 1
      %p113 = por %p111, %p112
      %p115 = scmp.ne.s32.totalorder %s98, %s114
      %p116 = scmp.eq.s32.totalorder %s38, 0
      %p117 = por %p115, %p116
      %s119 = sadd.s32 %s118, 1
      %p122 = scmp.eq.s32.totalorder %s32, 1
      %p123 = scmp.ne.s32.totalorder %s118, %s120
      %p124 = scmp.eq.s32.totalorder %s32, 0
      %p125 = por %p123, %p124
      %p126 = scmp.ne.s32.totalorder %s118, %s120
      %p127 = scmp.eq.s32.totalorder %s37, 1
      %p128 = por %p126, %p127
      %p129 = scmp.ne.s32.totalorder %s120, %s121
      %p130 = scmp.eq.s32.totalorder %s37, 0
      %p131 = por %p129, %p130
      %p132 = scmp.ne.s32.totalorder %s120, %s121
      %p133 = scmp.eq.s32.totalorder %s38, 1
      %p134 = por %p132, %p133
      %p136 = scmp.ne.s32.totalorder %s121, %s135
      %p137 = scmp.eq.s32.totalorder %s38, 0
      %p138 = por %p136, %p137
      %s140 = sadd.s32 %s139, 1
      %p143 = scmp.eq.s32.totalorder %s32, 1
      %p144 = scmp.ne.s32.totalorder %s139, %s141
      %p145 = scmp.eq.s32.totalorder %s32, 0
      %p146 = por %p144, %p145
      %p147 = scmp.ne.s32.totalorder %s139, %s141
      %p148 = scmp.eq.s32.totalorder %s37, 1
      %p149 = por %p147, %p148
      %p150 = scmp.ne.s32.totalorder %s141, %s142
      %p151 = scmp.eq.s32.totalorder %s37, 0
      %p152 = por %p150, %p151
      %p153 = scmp.ne.s32.totalorder %s141, %s142
      %p154 = scmp.eq.s32.totalorder %s38, 1
      %p155 = por %p153, %p154
      %p157 = scmp.ne.s32.totalorder %s142, %s156
      %p158 = scmp.eq.s32.totalorder %s38, 0
      %p159 = por %p157, %p158
      %s161 = sadd.s32 %s160, 1
      %p164 = scmp.eq.s32.totalorder %s32, 1
      %p165 = scmp.ne.s32.totalorder %s160, %s162
      %p166 = scmp.eq.s32.totalorder %s32, 0
      %p167 = por %p165, %p166
      %p168 = scmp.ne.s32.totalorder %s160, %s162
      %p169 = scmp.eq.s32.totalorder %s37, 1
      %p170 = por %p168, %p169
      %p171 = scmp.ne.s32.totalorder %s162, %s163
      %p172 = scmp.eq.s32.totalorder %s37, 0
      %p173 = por %p171, %p172
      %p174 = scmp.ne.s32.totalorder %s162, %s163
      %p175 = scmp.eq.s32.totalorder %s38, 1
      %p176 = por %p174, %p175
      %p178 = scmp.ne.s32.totalorder %s163, %s177
      %p179 = scmp.eq.s32.totalorder %s38, 0
      %p180 = por %p178, %p179
      %s182 = sadd.s32 %s181, 1
      %p185 = scmp.eq.s32.totalorder %s32, 1
      %p186 = scmp.ne.s32.totalorder %s181, %s183
      %p187 = scmp.eq.s32.totalorder %s32, 0
      %p188 = por %p186, %p187
      %p189 = scmp.ne.s32.totalorder %s181, %s183
      %p190 = scmp.eq.s32.totalorder %s37, 1
      %p191 = por %p189, %p190
      %p192 = scmp.ne.s32.totalorder %s183, %s184
      %p193 = scmp.eq.s32.totalorder %s37, 0
      %p194 = por %p192, %p193
      %p195 = scmp.ne.s32.totalorder %s183, %s184
      %p196 = scmp.eq.s32.totalorder %s38, 1
      %p197 = por %p195, %p196
      %p199 = scmp.ne.s32.totalorder %s184, %s198
      %p200 = scmp.eq.s32.totalorder %s38, 0
      %p201 = por %p199, %p200
      %s203 = sadd.s32 %s202, 1
      %p206 = scmp.eq.s32.totalorder %s32, 1
      %p207 = scmp.ne.s32.totalorder %s202, %s204
      %p208 = scmp.eq.s32.totalorder %s32, 0
      %p209 = por %p207, %p208
      %p210 = scmp.ne.s32.totalorder %s202, %s204
      %p211 = scmp.eq.s32.totalorder %s37, 1
      %p212 = por %p210, %p211
      %p213 = scmp.ne.s32.totalorder %s204, %s205
      %p214 = scmp.eq.s32.totalorder %s37, 0
      %p215 = por %p213, %p214
      %p216 = scmp.ne.s32.totalorder %s204, %s205
      %p217 = scmp.eq.s32.totalorder %s38, 1
      %p218 = por %p216, %p217
      %p220 = scmp.ne.s32.totalorder %s205, %s219
      %p221 = scmp.eq.s32.totalorder %s38, 0
      %p222 = por %p220, %p221
      %s224 = sadd.s32 %s223, 1
      %p227 = scmp.eq.s32.totalorder %s32, 1
      %p228 = scmp.ne.s32.totalorder %s223, %s225
      %p229 = scmp.eq.s32.totalorder %s32, 0
      %p230 = por %p228, %p229
      %p231 = scmp.ne.s32.totalorder %s223, %s225
      %p232 = scmp.eq.s32.totalorder %s37, 1
      %p233 = por %p231, %p232
      %p234 = scmp.ne.s32.totalorder %s225, %s226
      %p235 = scmp.eq.s32.totalorder %s37, 0
      %p236 = por %p234, %p235
      %p237 = scmp.ne.s32.totalorder %s225, %s226
      %p238 = scmp.eq.s32.totalorder %s38, 1
      %p239 = por %p237, %p238
      %p241 = scmp.ne.s32.totalorder %s226, %s240
      %p242 = scmp.eq.s32.totalorder %s38, 0
      %p243 = por %p241, %p242
      %s245 = sadd.s32 %s244, 1
      %p248 = scmp.eq.s32.totalorder %s32, 1
      %p249 = scmp.ne.s32.totalorder %s244, %s246
      %p250 = scmp.eq.s32.totalorder %s32, 0
      %p251 = por %p249, %p250
      %p252 = scmp.ne.s32.totalorder %s244, %s246
      %p253 = scmp.eq.s32.totalorder %s37, 1
      %p254 = por %p252, %p253
      %p255 = scmp.ne.s32.totalorder %s246, %s247
      %p256 = scmp.eq.s32.totalorder %s37, 0
      %p257 = por %p255, %p256
      %p258 = scmp.ne.s32.totalorder %s246, %s247
      %p259 = scmp.eq.s32.totalorder %s38, 1
      %p260 = por %p258, %p259
      %p262 = scmp.ne.s32.totalorder %s247, %s261
      %p263 = scmp.eq.s32.totalorder %s38, 0
      %p264 = por %p262, %p263
      %s266 = sadd.s32 %s265, 1
      %p269 = scmp.eq.s32.totalorder %s32, 1
      %p270 = scmp.ne.s32.totalorder %s265, %s267
      %p271 = scmp.eq.s32.totalorder %s32, 0
      %p272 = por %p270, %p271
      %p273 = scmp.ne.s32.totalorder %s265, %s267
      %p274 = scmp.eq.s32.totalorder %s37, 1
      %p275 = por %p273, %p274
      %p276 = scmp.ne.s32.totalorder %s267, %s268
      %p277 = scmp.eq.s32.totalorder %s37, 0
      %p278 = por %p276, %p277
      %p279 = scmp.ne.s32.totalorder %s267, %s268
      %p280 = scmp.eq.s32.totalorder %s38, 1
      %p281 = por %p279, %p280
      %p283 = scmp.ne.s32.totalorder %s268, %s282
      %p284 = scmp.eq.s32.totalorder %s38, 0
      %p285 = por %p283, %p284
      %s287 = sadd.s32 %s286, 1
      %p290 = scmp.eq.s32.totalorder %s32, 1
      %p291 = scmp.ne.s32.totalorder %s286, %s288
      %p292 = scmp.eq.s32.totalorder %s32, 0
      %p293 = por %p291, %p292
      %p294 = scmp.ne.s32.totalorder %s286, %s288
      %p295 = scmp.eq.s32.totalorder %s37, 1
      %p296 = por %p294, %p295
      %p297 = scmp.ne.s32.totalorder %s288, %s289
      %p298 = scmp.eq.s32.totalorder %s37, 0
      %p299 = por %p297, %p298
      %p300 = scmp.ne.s32.totalorder %s288, %s289
      %p301 = scmp.eq.s32.totalorder %s38, 1
      %p302 = por %p300, %p301
      %p304 = scmp.ne.s32.totalorder %s289, %s303
      %p305 = scmp.eq.s32.totalorder %s38, 0
      %p306 = por %p304, %p305
      %s308 = sadd.s32 %s307, 1
      %p311 = scmp.eq.s32.totalorder %s32, 1
      %p312 = scmp.ne.s32.totalorder %s307, %s309
      %p313 = scmp.eq.s32.totalorder %s32, 0
      %p314 = por %p312, %p313
      %p315 = scmp.ne.s32.totalorder %s307, %s309
      %p316 = scmp.eq.s32.totalorder %s37, 1
      %p317 = por %p315, %p316
      %p318 = scmp.ne.s32.totalorder %s309, %s310
      %p319 = scmp.eq.s32.totalorder %s37, 0
      %p320 = por %p318, %p319
      %p321 = scmp.ne.s32.totalorder %s309, %s310
      %p322 = scmp.eq.s32.totalorder %s38, 1
      %p323 = por %p321, %p322
      %p325 = scmp.ne.s32.totalorder %s310, %s324
      %p326 = scmp.eq.s32.totalorder %s38, 0
      %p327 = por %p325, %p326
      %s329 = sadd.s32 %s328, 1
      %p332 = scmp.eq.s32.totalorder %s32, 1
      %p333 = scmp.ne.s32.totalorder %s328, %s330
      %p334 = scmp.eq.s32.totalorder %s32, 0
      %p335 = por %p333, %p334
      %p336 = scmp.ne.s32.totalorder %s328, %s330
      %p337 = scmp.eq.s32.totalorder %s37, 1
      %p338 = por %p336, %p337
      %p339 = scmp.ne.s32.totalorder %s330, %s331
      %p340 = scmp.eq.s32.totalorder %s37, 0
      %p341 = por %p339, %p340
      %p342 = scmp.ne.s32.totalorder %s330, %s331
      %p343 = scmp.eq.s32.totalorder %s38, 1
      %p344 = por %p342, %p343
      %p346 = scmp.ne.s32.totalorder %s331, %s345
      %p347 = scmp.eq.s32.totalorder %s38, 0
      %p348 = por %p346, %p347
      %s350 = sadd.s32 %s349, 1
      %p353 = scmp.eq.s32.totalorder %s32, 1
      %p354 = scmp.ne.s32.totalorder %s349, %s351
      %p355 = scmp.eq.s32.totalorder %s32, 0
      %p356 = por %p354, %p355
      %p357 = scmp.ne.s32.totalorder %s349, %s351
      %p358 = scmp.eq.s32.totalorder %s37, 1
      %p359 = por %p357, %p358
      %p360 = scmp.ne.s32.totalorder %s351, %s352
      %p361 = scmp.eq.s32.totalorder %s37, 0
      %p362 = por %p360, %p361
      %p363 = scmp.ne.s32.totalorder %s351, %s352
      %p364 = scmp.eq.s32.totalorder %s38, 1
      %p365 = por %p363, %p364
      %p367 = scmp.ne.s32.totalorder %s352, %s366
      %p368 = scmp.eq.s32.totalorder %s38, 0
      %p369 = por %p367, %p368
      %s370 = ssub.s32 %s32, %s39
      %p371 = scmp.eq.s32.totalorder %s370, 0
      %s373 = sadd.s32 %s372, 1
      %s374 = scalar_select %p371, %s372, %s373
      %p377 = pneg %p371
      %p378 = scmp.eq.s32.totalorder %s32, 1
      %p379 = por %p377, %p378
      %p380 = scmp.ne.s32.totalorder %s372, %s375
      %p381 = scmp.eq.s32.totalorder %s32, 0
      %p382 = por %p380, %p381
      %p383 = scmp.ne.s32.totalorder %s372, %s375
      %p384 = scmp.eq.s32.totalorder %s37, 1
      %p385 = por %p383, %p384
      %p386 = scmp.ne.s32.totalorder %s375, %s376
      %p387 = scmp.eq.s32.totalorder %s37, 0
      %p388 = por %p386, %p387
      %p389 = scmp.ne.s32.totalorder %s375, %s376
      %p390 = scmp.eq.s32.totalorder %s38, 1
      %p391 = por %p389, %p390
      %p393 = scmp.ne.s32.totalorder %s376, %s392
      %p394 = scmp.eq.s32.totalorder %s38, 0
      %p395 = por %p393, %p394
      %p396 = scmp.le.s32.totalorder 1, %s32
      %p397 = scmp.lt.s32.totalorder %s32, 3
      %p398 = pnand %p396, %p397
      %p399 = pneg %p398
      // Predicated region
      $region9: #{tpu_custom_call.1} parent=5 // pred_check
        _
      $region10: #{tpu_custom_call.1} parent=5 // pred_check_branch
        %401 = sbr.rel (%p398) target = $region12
      $region11: #{tpu_custom_call.1} parent=5 // pred_region
        %s402 = ssub.s32 %s32, 1
        // Predicated region
        $region13: #{tpu_custom_call.1} parent=11 // pred_check
          %p403 = pneg %p131
        $region14: #{tpu_custom_call.1} parent=11 // pred_check_branch
          %405 = sbr.rel (%p403) target = $region16
        $region15: #{tpu_custom_call.1} parent=11 // pred_region
          _
        $region16: #{tpu_custom_call.1} parent=11 // pred_fallthru
          _
        // Predicated region
        $region17: #{tpu_custom_call.1} parent=11 // pred_check
          %p406 = pneg %p152
        $region18: #{tpu_custom_call.1} parent=11 // pred_check_branch
          %408 = sbr.rel (%p406) target = $region20
        $region19: #{tpu_custom_call.1} parent=11 // pred_region
          _
        $region20: #{tpu_custom_call.1} parent=11 // pred_fallthru
          _
        // Predicated region
        $region21: #{tpu_custom_call.1} parent=11 // pred_check
          %p409 = pneg %p173
        $region22: #{tpu_custom_call.1} parent=11 // pred_check_branch
          %411 = sbr.rel (%p409) target = $region24
        $region23: #{tpu_custom_call.1} parent=11 // pred_region
          _
        $region24: #{tpu_custom_call.1} parent=11 // pred_fallthru
          _
        // Predicated region
        $region25: #{tpu_custom_call.1} parent=11 // pred_check
          %p412 = pneg %p194
        $region26: #{tpu_custom_call.1} parent=11 // pred_check_branch
          %414 = sbr.rel (%p412) target = $region28
        $region27: #{tpu_custom_call.1} parent=11 // pred_region
          %s416 = ssub.s32 256, 256
          %417 = vsyncadd [#allocation10], %s416
          %s418 = sshll.u32 [#allocation9], 4
          %s419 = int_to_ptr.vmem [resolvable:$true] %s418
          %424 = dma.hbm_to_vmem [thread:$0]  %s6, 256, %s419, [#allocation10], 64, 64, 4
        $region28: #{tpu_custom_call.1} parent=11 // pred_fallthru
          _
        // Predicated region
        $region29: #{tpu_custom_call.1} parent=11 // pred_check
          %p425 = pneg %p215
        $region30: #{tpu_custom_call.1} parent=11 // pred_check_branch
          %427 = sbr.rel (%p425) target = $region32
        $region31: #{tpu_custom_call.1} parent=11 // pred_region
          %s429 = ssub.s32 16, 16
          %430 = vsyncadd [#allocation10], %s429
          %s432 = sshll.u32 [#allocation11], 4
          %s433 = int_to_ptr.vmem [resolvable:$true] %s432
          %435 = dma.hbm_to_vmem [thread:$0]  %s7, 16, %s433, [#allocation10]
        $region32: #{tpu_custom_call.1} parent=11 // pred_fallthru
          _
        // Predicated region
        $region33: #{tpu_custom_call.1} parent=11 // pred_check
          %p436 = pneg %p236
        $region34: #{tpu_custom_call.1} parent=11 // pred_check_branch
          %438 = sbr.rel (%p436) target = $region36
        $region35: #{tpu_custom_call.1} parent=11 // pred_region
          %s440 = ssub.s32 16, 16
          %441 = vsyncadd [#allocation13], %s440
          %s443 = sshll.u32 [#allocation12], 4
          %s444 = int_to_ptr.vmem [resolvable:$true] %s443
          %446 = dma.hbm_to_vmem [thread:$0]  %s8, 16, %s444, [#allocation13]
        $region36: #{tpu_custom_call.1} parent=11 // pred_fallthru
          _
        // Predicated region
        $region37: #{tpu_custom_call.1} parent=11 // pred_check
          %p447 = pneg %p257
        $region38: #{tpu_custom_call.1} parent=11 // pred_check_branch
          %449 = sbr.rel (%p447) target = $region40
        $region39: #{tpu_custom_call.1} parent=11 // pred_region
          _
        $region40: #{tpu_custom_call.1} parent=11 // pred_fallthru
          _
        // Predicated region
        $region41: #{tpu_custom_call.1} parent=11 // pred_check
          %p450 = pneg %p278
        $region42: #{tpu_custom_call.1} parent=11 // pred_check_branch
          %452 = sbr.rel (%p450) target = $region44
        $region43: #{tpu_custom_call.1} parent=11 // pred_region
          _
        $region44: #{tpu_custom_call.1} parent=11 // pred_fallthru
          _
        // Predicated region
        $region45: #{tpu_custom_call.1} parent=11 // pred_check
          %p453 = pneg %p299
        $region46: #{tpu_custom_call.1} parent=11 // pred_check_branch
          %455 = sbr.rel (%p453) target = $region48
        $region47: #{tpu_custom_call.1} parent=11 // pred_region
          _
        $region48: #{tpu_custom_call.1} parent=11 // pred_fallthru
          _
        // Predicated region
        $region49: #{tpu_custom_call.1} parent=11 // pred_check
          %p456 = pneg %p320
        $region50: #{tpu_custom_call.1} parent=11 // pred_check_branch
          %458 = sbr.rel (%p456) target = $region52
        $region51: #{tpu_custom_call.1} parent=11 // pred_region
          _
        $region52: #{tpu_custom_call.1} parent=11 // pred_fallthru
          _
        // Predicated region
        $region53: #{tpu_custom_call.1} parent=11 // pred_check
          %p459 = pneg %p341
        $region54: #{tpu_custom_call.1} parent=11 // pred_check_branch
          %461 = sbr.rel (%p459) target = $region56
        $region55: #{tpu_custom_call.1} parent=11 // pred_region
          _
        $region56: #{tpu_custom_call.1} parent=11 // pred_fallthru
          _
        // Predicated region
        $region57: #{tpu_custom_call.1} parent=11 // pred_check
          %p462 = pneg %p362
        $region58: #{tpu_custom_call.1} parent=11 // pred_check_branch
          %464 = sbr.rel (%p462) target = $region60
        $region59: #{tpu_custom_call.1} parent=11 // pred_region
          _
        $region60: #{tpu_custom_call.1} parent=11 // pred_fallthru
          _
      $region12: #{tpu_custom_call.1} parent=5 // pred_fallthru
        _
      %p465 = scmp.lt.s32.totalorder %s32, 2
      // Predicated region
      $region61: #{tpu_custom_call.1} parent=5 // pred_check
        %p466 = pneg %p465
      $region62: #{tpu_custom_call.1} parent=5 // pred_check_branch
        %468 = sbr.rel (%p466) target = $region64
      $region63: #{tpu_custom_call.1} parent=5 // pred_region
        // Predicated region
        $region65: #{tpu_custom_call.1} parent=63 // pred_check
          %p469 = pneg %p52
        $region66: #{tpu_custom_call.1} parent=63 // pred_check_branch
          %471 = sbr.rel (%p469) target = $region68
        $region67: #{tpu_custom_call.1} parent=63 // pred_region
          %s472 = sand.u32 %s42, 1
          %s473 = scalar_lea.sflag [#allocation4], %s472
          %s474 = sand.u32 %s42, 1
          %s475 = smul.addr %s474, 4
          %s476 = scalar_lea.vmem [#allocation3], %s475
          %s478 = ssub.s32 64, 64
          %479 = vsyncadd %s473, %s478
          %s480 = smul.addr %s32, 64
          %s481 = scalar_lea.hbm %s0, %s480
          %s483 = sshll.u32 %s476, 4
          %s484 = int_to_ptr.vmem [resolvable:$true] %s483
          %486 = dma.hbm_to_vmem [thread:$0]  %s481, 64, %s484, %s473
        $region68: #{tpu_custom_call.1} parent=63 // pred_fallthru
          _
        // Predicated region
        $region69: #{tpu_custom_call.1} parent=63 // pred_check
          %p487 = pneg %p78
        $region70: #{tpu_custom_call.1} parent=63 // pred_check_branch
          %489 = sbr.rel (%p487) target = $region72
        $region71: #{tpu_custom_call.1} parent=63 // pred_region
          %s490 = sand.u32 %s32, 1
          %s491 = scalar_lea.sflag [#allocation7], %s490
          %s492 = sand.u32 %s68, 1
          %s493 = smul.addr %s492, 4
          %s494 = scalar_lea.vmem [#allocation6], %s493
          %s496 = ssub.s32 64, 64
          %497 = vsyncadd %s491, %s496
          %s498 = smul.addr %s32, 64
          %s499 = scalar_lea.hbm %s1, %s498
          %s501 = sshll.u32 %s494, 4
          %s502 = int_to_ptr.vmem [resolvable:$true] %s501
          %504 = dma.hbm_to_vmem [thread:$0]  %s499, 64, %s502, %s491
        $region72: #{tpu_custom_call.1} parent=63 // pred_fallthru
          _
        // Predicated region
        $region73: #{tpu_custom_call.1} parent=63 // pred_check
          %p505 = pneg %p104
        $region74: #{tpu_custom_call.1} parent=63 // pred_check_branch
          %507 = sbr.rel (%p505) target = $region76
        $region75: #{tpu_custom_call.1} parent=63 // pred_region
          %s508 = sand.u32 %s32, 1
          %s509 = scalar_lea.sflag [#allocation7], %s508
          %s510 = sand.u32 %s94, 1
          %s511 = smul.addr %s510, 4
          %s512 = scalar_lea.vmem [#allocation8], %s511
          %s514 = ssub.s32 64, 64
          %515 = vsyncadd %s509, %s514
          %s516 = smul.addr %s32, 64
          %s517 = scalar_lea.hbm %s2, %s516
          %s519 = sshll.u32 %s512, 4
          %s520 = int_to_ptr.vmem [resolvable:$true] %s519
          %522 = dma.hbm_to_vmem [thread:$0]  %s517, 64, %s520, %s509
        $region76: #{tpu_custom_call.1} parent=63 // pred_fallthru
          _
      $region64: #{tpu_custom_call.1} parent=5 // pred_fallthru
        _
      %p523 = scmp.le.s32.totalorder 1, %s32
      %p524 = scmp.lt.s32.totalorder %s32, 3
      %p525 = pnand %p523, %p524
      %p526 = pneg %p525
      // Predicated region
      $region77: #{tpu_custom_call.1} parent=5 // pred_check
        _
      $region78: #{tpu_custom_call.1} parent=5 // pred_check_branch
        %528 = sbr.rel (%p525) target = $region80
      $region79: #{tpu_custom_call.1} parent=5 // pred_region
        %s529 = ssub.s32 %s32, 1
        %s530 = sand.u32 %s45, 1
        %s531 = scalar_lea.sflag [#allocation4], %s530
        %s532 = sand.u32 %s45, 1
        %s533 = smul.addr %s532, 4
        %s534 = scalar_lea.vmem [#allocation3], %s533
        // Predicated region
        $region81: #{tpu_custom_call.1} parent=79 // pred_check
          %p535 = pneg %p58
        $region82: #{tpu_custom_call.1} parent=79 // pred_check_branch
          %537 = sbr.rel (%p535) target = $region84
        $region83: #{tpu_custom_call.1} parent=79 // pred_region
          %538 = dma.done %s531, 64
        $region84: #{tpu_custom_call.1} parent=79 // pred_fallthru
          _
        %s539 = sand.u32 %s37, 1
        %s540 = scalar_lea.sflag [#allocation7], %s539
        %s541 = sand.u32 %s71, 1
        %s542 = smul.addr %s541, 4
        %s543 = scalar_lea.vmem [#allocation6], %s542
        // Predicated region
        $region85: #{tpu_custom_call.1} parent=79 // pred_check
          %p544 = pneg %p84
        $region86: #{tpu_custom_call.1} parent=79 // pred_check_branch
          %546 = sbr.rel (%p544) target = $region88
        $region87: #{tpu_custom_call.1} parent=79 // pred_region
          %547 = dma.done %s540, 64
        $region88: #{tpu_custom_call.1} parent=79 // pred_fallthru
          _
        %s548 = sand.u32 %s37, 1
        %s549 = scalar_lea.sflag [#allocation7], %s548
        %s550 = sand.u32 %s97, 1
        %s551 = smul.addr %s550, 4
        %s552 = scalar_lea.vmem [#allocation8], %s551
        // Predicated region
        $region89: #{tpu_custom_call.1} parent=79 // pred_check
          %p553 = pneg %p110
        $region90: #{tpu_custom_call.1} parent=79 // pred_check_branch
          %555 = sbr.rel (%p553) target = $region92
        $region91: #{tpu_custom_call.1} parent=79 // pred_region
          %556 = dma.done %s549, 64
        $region92: #{tpu_custom_call.1} parent=79 // pred_fallthru
          _
        // Predicated region
        $region93: #{tpu_custom_call.1} parent=79 // pred_check
          %p557 = pneg %p194
        $region94: #{tpu_custom_call.1} parent=79 // pred_check_branch
          %559 = sbr.rel (%p557) target = $region96
        $region95: #{tpu_custom_call.1} parent=79 // pred_region
          %560 = dma.done [#allocation10], 256
        $region96: #{tpu_custom_call.1} parent=79 // pred_fallthru
          _
        // Predicated region
        $region97: #{tpu_custom_call.1} parent=79 // pred_check
          %p561 = pneg %p215
        $region98: #{tpu_custom_call.1} parent=79 // pred_check_branch
          %563 = sbr.rel (%p561) target = $region100
        $region99: #{tpu_custom_call.1} parent=79 // pred_region
          %564 = dma.done [#allocation10], 16
        $region100: #{tpu_custom_call.1} parent=79 // pred_fallthru
          _
        // Predicated region
        $region101: #{tpu_custom_call.1} parent=79 // pred_check
          %p565 = pneg %p236
        $region102: #{tpu_custom_call.1} parent=79 // pred_check_branch
          %567 = sbr.rel (%p565) target = $region104
        $region103: #{tpu_custom_call.1} parent=79 // pred_region
          %568 = dma.done [#allocation13], 16
        $region104: #{tpu_custom_call.1} parent=79 // pred_fallthru
          _
        %s569 = sand.u32 %s45, 1
        %s570 = scalar_lea.sflag [#allocation4], %s569
        %s571 = sand.u32 %s45, 1
        %s572 = smul.addr %s571, 4
        %s573 = scalar_lea.vmem [#allocation3], %s572
        %p574 = pneg %p58
        %p575 = pneg %p55
        %s576 = sand.u32 %s37, 1
        %s577 = scalar_lea.sflag [#allocation7], %s576
        %s578 = sand.u32 %s71, 1
        %s579 = smul.addr %s578, 4
        %s580 = scalar_lea.vmem [#allocation6], %s579
        %p581 = pneg %p84
        %p582 = pneg %p81
        %s583 = sand.u32 %s37, 1
        %s584 = scalar_lea.sflag [#allocation7], %s583
        %s585 = sand.u32 %s97, 1
        %s586 = smul.addr %s585, 4
        %s587 = scalar_lea.vmem [#allocation8], %s586
        %p588 = pneg %p110
        %p589 = pneg %p107
        %p590 = pneg %p131
        %p591 = pneg %p128
        %p592 = pneg %p152
        %p593 = pneg %p149
        %p594 = pneg %p173
        %p595 = pneg %p170
        %p596 = pneg %p194
        %p597 = pneg %p191
        %p598 = pneg %p215
        %p599 = pneg %p212
        %p600 = pneg %p236
        %p601 = pneg %p233
        %p602 = pneg %p257
        %p603 = pneg %p254
        %p604 = pneg %p278
        %p605 = pneg %p275
        %p606 = pneg %p299
        %p607 = pneg %p296
        %p608 = pneg %p320
        %p609 = pneg %p317
        %p610 = pneg %p341
        %p611 = pneg %p338
        %p612 = pneg %p362
        %p613 = pneg %p359
        %p614 = pneg %p388
        %p615 = pneg %p385
        %s616 = sand.u32 %s375, 1
        %s617 = scalar_lea.sflag [#allocation5], %s616
        %s618 = sand.u32 %s375, 1
        %s619 = smul.addr %s618, 8
        %s620 = scalar_lea.vmem [#allocation14], %s619
        %v622 = vld [vmem:[%s534] sm:$0xf]
        %v623 = vld [vmem:[%s543] sm:$0xf]
        %v624 = vld [vmem:[%s552] sm:$0xf]
        %v625 = vld [vmem:[%s3] sm:$0xf]
        %v626 = vld [vmem:[%s3 + $0x4] sm:$0xf]
        %v627 = vld [vmem:[%s3 + $0x8] sm:$0xf]
        %v628 = vld [vmem:[%s3 + $0xc] sm:$0xf]
        %v633 = vunpack.c.l.b16 %v625
        %v634 = vunpack.c.l.b16 %v626
        %v635 = vunpack.c.l.b16 %v627
        %v636 = vunpack.c.l.b16 %v628
        %v637 = vpack.c.b16 %v634, %v633
        %v638 = vpack.c.b16 %v636, %v635
        %vm641 = vcmask 261120
        %v643 = vsel %vm641, %v622, 0
        %645 = vmatprep.subr.bf16.mxu0 0
        %646 = vmatpush1.bf16.msra.mxu0 0
        %647 = vmatprep.subr.bf16.mxu0 0
        %648 = vmatpush1.bf16.msra.mxu0 0
        %649 = vmatprep.subr.bf16.mxu0 0
        %650 = vmatpush1.bf16.msra.mxu0 0
        %651 = vmatprep.subr.bf16.mxu0 0
        %652 = vmatpush1.bf16.msra.mxu0 0
        %653 = vmatprep.subr.bf16.mxu0 0
        %654 = vmatpush1.bf16.msra.mxu0 0
        %655 = vmatprep.subr.bf16.mxu0 0
        %656 = vmatpush1.bf16.msra.mxu0 0
        %657 = vmatprep.subr.bf16.mxu0 0
        %658 = vmatpush1.bf16.msra.mxu0 %v638
        %659 = vmatprep.subr.bf16.mxu0 0
        %660 = vmatpush1.bf16.msra.mxu0 %v637
        %661 = vmatprep.subr.bf16.mxu0 0
        %662 = vmatpush2.bf16.msra.mxu0 0
        %663 = vmatprep.subr.bf16.mxu0 0
        %664 = vmatpush2.bf16.msra.mxu0 0
        %665 = vmatprep.subr.bf16.mxu0 0
        %666 = vmatpush2.bf16.msra.mxu0 0
        %667 = vmatprep.subr.bf16.mxu0 0
        %668 = vmatpush2.bf16.msra.mxu0 0
        %669 = vmatprep.subr.bf16.mxu0 0
        %670 = vmatpush2.bf16.msra.mxu0 0
        %671 = vmatprep.subr.bf16.mxu0 0
        %672 = vmatpush2.bf16.msra.mxu0 0
        %673 = vmatprep.subr.bf16.mxu0 0
        %674 = vmatpush2.bf16.msra.mxu0 0
        %675 = vmatprep.subr.bf16.mxu0 0
        %676 = vmatpush2.bf16.msra.mxu0 0
        %677 = vmatprep.mubr.bf16.mxu0 0
        %678 = vmatmul.mubr.bf16.gmra.mxu0 %v643
        %v679 = vpop.f32.mrf.mxu0
        %v680 = vadd.f32 0.0, %v679
        %v681 = vpop.f32.mrf.mxu0
        %v682 = vpop.f32.mrf.mxu0
        %v683 = vpop.f32.mrf.mxu0
        %684 = vdwg.mxu0
        %v685 = vmul.f32 %v680, 0.35355338
        %v686 = vld [vmem:[%s4] sm:$0xf]
        %v687 = vld [vmem:[%s4 + $0x4] sm:$0xf]
        %v688 = vld [vmem:[%s4 + $0x8] sm:$0xf]
        %v689 = vld [vmem:[%s4 + $0xc] sm:$0xf]
        %v694 = vunpack.c.l.b16 %v686
        %v695 = vunpack.c.l.b16 %v687
        %v696 = vunpack.c.l.b16 %v688
        %v697 = vunpack.c.l.b16 %v689
        %v698 = vpack.c.b16 %v695, %v694
        %v699 = vpack.c.b16 %v697, %v696
        %v703 = vsel %vm641, %v623, 0
        %705 = vmatprep.subr.bf16.mxu0 0
        %706 = vmatpush1.bf16.msra.mxu0 0
        %707 = vmatprep.subr.bf16.mxu0 0
        %708 = vmatpush1.bf16.msra.mxu0 0
        %709 = vmatprep.subr.bf16.mxu0 0
        %710 = vmatpush1.bf16.msra.mxu0 0
        %711 = vmatprep.subr.bf16.mxu0 0
        %712 = vmatpush1.bf16.msra.mxu0 0
        %713 = vmatprep.subr.bf16.mxu0 0
        %714 = vmatpush1.bf16.msra.mxu0 0
        %715 = vmatprep.subr.bf16.mxu0 0
        %716 = vmatpush1.bf16.msra.mxu0 0
        %717 = vmatprep.subr.bf16.mxu0 0
        %718 = vmatpush1.bf16.msra.mxu0 %v699
        %719 = vmatprep.subr.bf16.mxu0 0
        %720 = vmatpush1.bf16.msra.mxu0 %v698
        %721 = vmatprep.subr.bf16.mxu0 0
        %722 = vmatpush2.bf16.msra.mxu0 0
        %723 = vmatprep.subr.bf16.mxu0 0
        %724 = vmatpush2.bf16.msra.mxu0 0
        %725 = vmatprep.subr.bf16.mxu0 0
        %726 = vmatpush2.bf16.msra.mxu0 0
        %727 = vmatprep.subr.bf16.mxu0 0
        %728 = vmatpush2.bf16.msra.mxu0 0
        %729 = vmatprep.subr.bf16.mxu0 0
        %730 = vmatpush2.bf16.msra.mxu0 0
        %731 = vmatprep.subr.bf16.mxu0 0
        %732 = vmatpush2.bf16.msra.mxu0 0
        %733 = vmatprep.subr.bf16.mxu0 0
        %734 = vmatpush2.bf16.msra.mxu0 0
        %735 = vmatprep.subr.bf16.mxu0 0
        %736 = vmatpush2.bf16.msra.mxu0 0
        %737 = vmatprep.mubr.bf16.mxu0 0
        %738 = vmatmul.mubr.bf16.gmra.mxu0 %v703
        %v739 = vpop.f32.mrf.mxu0
        %v740 = vadd.f32 0.0, %v739
        %v741 = vpop.f32.mrf.mxu0
        %v742 = vpop.f32.mrf.mxu0
        %v743 = vpop.f32.mrf.mxu0
        %744 = vdwg.mxu0
        %v745 = vld [vmem:[%s5] sm:$0xf]
        %v746 = vld [vmem:[%s5 + $0x4] sm:$0xf]
        %v747 = vld [vmem:[%s5 + $0x8] sm:$0xf]
        %v748 = vld [vmem:[%s5 + $0xc] sm:$0xf]
        %v753 = vunpack.c.l.b16 %v745
        %v754 = vunpack.c.l.b16 %v746
        %v755 = vunpack.c.l.b16 %v747
        %v756 = vunpack.c.l.b16 %v748
        %v757 = vpack.c.b16 %v754, %v753
        %v758 = vpack.c.b16 %v756, %v755
        %v762 = vsel %vm641, %v624, 0
        %764 = vmatprep.subr.bf16.mxu0 0
        %765 = vmatpush1.bf16.msra.mxu0 0
        %766 = vmatprep.subr.bf16.mxu0 0
        %767 = vmatpush1.bf16.msra.mxu0 0
        %768 = vmatprep.subr.bf16.mxu0 0
        %769 = vmatpush1.bf16.msra.mxu0 0
        %770 = vmatprep.subr.bf16.mxu0 0
        %771 = vmatpush1.bf16.msra.mxu0 0
        %772 = vmatprep.subr.bf16.mxu0 0
        %773 = vmatpush1.bf16.msra.mxu0 0
        %774 = vmatprep.subr.bf16.mxu0 0
        %775 = vmatpush1.bf16.msra.mxu0 0
        %776 = vmatprep.subr.bf16.mxu0 0
        %777 = vmatpush1.bf16.msra.mxu0 %v758
        %778 = vmatprep.subr.bf16.mxu0 0
        %779 = vmatpush1.bf16.msra.mxu0 %v757
        %780 = vmatprep.subr.bf16.mxu0 0
        %781 = vmatpush2.bf16.msra.mxu0 0
        %782 = vmatprep.subr.bf16.mxu0 0
        %783 = vmatpush2.bf16.msra.mxu0 0
        %784 = vmatprep.subr.bf16.mxu0 0
        %785 = vmatpush2.bf16.msra.mxu0 0
        %786 = vmatprep.subr.bf16.mxu0 0
        %787 = vmatpush2.bf16.msra.mxu0 0
        %788 = vmatprep.subr.bf16.mxu0 0
        %789 = vmatpush2.bf16.msra.mxu0 0
        %790 = vmatprep.subr.bf16.mxu0 0
        %791 = vmatpush2.bf16.msra.mxu0 0
        %792 = vmatprep.subr.bf16.mxu0 0
        %793 = vmatpush2.bf16.msra.mxu0 0
        %794 = vmatprep.subr.bf16.mxu0 0
        %795 = vmatpush2.bf16.msra.mxu0 0
        %796 = vmatprep.mubr.bf16.mxu0 0
        %797 = vmatmul.mubr.bf16.gmra.mxu0 %v762
        %v798 = vpop.f32.mrf.mxu0
        %v799 = vadd.f32 0.0, %v798
        %v800 = vpop.f32.mrf.mxu0
        %v801 = vpop.f32.mrf.mxu0
        %v802 = vpop.f32.mrf.mxu0
        %803 = vdwg.mxu0
        %vm804 = vcmask 64512
        %v806 = vsel %vm804, %v685, 0
        %v809 = vsel %vm804, %v740, 0
        %811 = vmatprep.subr.mxu0 0.0
        %812 = vmatpush1.xpose.msra.mxu0 0.0
        %813 = vmatprep.subr.mxu0 0.0
        %814 = vmatpush1.xpose.msra.mxu0 0.0
        %815 = vmatprep.subr.mxu0 0.0
        %816 = vmatpush1.xpose.msra.mxu0 0.0
        %817 = vmatprep.subr.mxu0 0.0
        %818 = vmatpush1.xpose.msra.mxu0 0.0
        %819 = vmatprep.subr.mxu0 0.0
        %820 = vmatpush1.xpose.msra.mxu0 0.0
        %821 = vmatprep.subr.mxu0 0.0
        %822 = vmatpush1.xpose.msra.mxu0 0.0
        %823 = vmatprep.subr.mxu0 0.0
        %824 = vmatpush1.xpose.msra.mxu0 0.0
        %825 = vmatprep.subr.mxu0 0.0
        %826 = vmatpush1.xpose.msra.mxu0 0.0
        %827 = vmatprep.subr.mxu0 0.0
        %828 = vmatpush1.xpose.msra.mxu0 0.0
        %829 = vmatprep.subr.mxu0 0.0
        %830 = vmatpush1.xpose.msra.mxu0 0.0
        %831 = vmatprep.subr.mxu0 0.0
        %832 = vmatpush1.xpose.msra.mxu0 0.0
        %833 = vmatprep.subr.mxu0 0.0
        %834 = vmatpush1.xpose.msra.mxu0 0.0
        %835 = vmatprep.subr.mxu0 0.0
        %836 = vmatpush1.xpose.msra.mxu0 0.0
        %837 = vmatprep.subr.mxu0 0.0
        %838 = vmatpush1.xpose.msra.mxu0 0.0
        %839 = vmatprep.subr.mxu0 0.0
        %840 = vmatpush1.xpose.msra.mxu0 0.0
        %841 = vmatprep.subr.mxu0 0.0
        %842 = vmatpush1.xpose.msra.mxu0 %v809
        %843 = vmatprep.subr.mxu0 0.0
        %844 = vmatpush2.xpose.msra.mxu0 0.0
        %845 = vmatprep.subr.mxu0 0.0
        %846 = vmatpush2.xpose.msra.mxu0 0.0
        %847 = vmatprep.subr.mxu0 0.0
        %848 = vmatpush2.xpose.msra.mxu0 0.0
        %849 = vmatprep.subr.mxu0 0.0
        %850 = vmatpush2.xpose.msra.mxu0 0.0
        %851 = vmatprep.subr.mxu0 0.0
        %852 = vmatpush2.xpose.msra.mxu0 0.0
        %853 = vmatprep.subr.mxu0 0.0
        %854 = vmatpush2.xpose.msra.mxu0 0.0
        %855 = vmatprep.subr.mxu0 0.0
        %856 = vmatpush2.xpose.msra.mxu0 0.0
        %857 = vmatprep.subr.mxu0 0.0
        %858 = vmatpush2.xpose.msra.mxu0 0.0
        %859 = vmatprep.subr.mxu0 0.0
        %860 = vmatpush2.xpose.msra.mxu0 0.0
        %861 = vmatprep.subr.mxu0 0.0
        %862 = vmatpush2.xpose.msra.mxu0 0.0
        %863 = vmatprep.subr.mxu0 0.0
        %864 = vmatpush2.xpose.msra.mxu0 0.0
        %865 = vmatprep.subr.mxu0 0.0
        %866 = vmatpush2.xpose.msra.mxu0 0.0
        %867 = vmatprep.subr.mxu0 0.0
        %868 = vmatpush2.xpose.msra.mxu0 0.0
        %869 = vmatprep.subr.mxu0 0.0
        %870 = vmatpush2.xpose.msra.mxu0 0.0
        %871 = vmatprep.subr.mxu0 0.0
        %872 = vmatpush2.xpose.msra.mxu0 0.0
        %873 = vmatprep.subr.mxu0 0.0
        %874 = vmatpush2.xpose.msra.mxu0 0.0
        %875 = vmatprep.mubr.f32.mxu0 0.0
        %876 = vmatmul.mubr.f32.gmra.mxu0 %v806
        %v877 = vpop.f32.mrf.mxu0
        %v878 = vadd.f32 0.0, %v877
        %v879 = vpop.f32.mrf.mxu0
        %880 = vdwg.mxu0
        %v881 = vsel %vm804, %v878, -inf
        %882 = vmax.xlane.f32.xlu0 %v881
        %v883 = vpop.xlane.xlu0 %882
        %v884 = vsub.f32 %v878, %v883
        %v885 = vmul.f32 %v884, 1.442695
        %v886 = vpow.pop %v885
        %v887 = vsel %vm804, %v886, 0.0
        %888 = vadd.xlane.f32.xlu0 %v887
        %v889 = vpop.xlane.xlu0 %888
        %v891 = vsel %vm804, %v886, 0
        %893 = vmatprep.subr.mxu0 0.0
        %894 = vmatpush1.msra.mxu0 0.0
        %895 = vmatprep.subr.mxu0 0.0
        %896 = vmatpush1.msra.mxu0 0.0
        %897 = vmatprep.subr.mxu0 0.0
        %898 = vmatpush1.msra.mxu0 0.0
        %899 = vmatprep.subr.mxu0 0.0
        %900 = vmatpush1.msra.mxu0 0.0
        %901 = vmatprep.subr.mxu0 0.0
        %902 = vmatpush1.msra.mxu0 0.0
        %903 = vmatprep.subr.mxu0 0.0
        %904 = vmatpush1.msra.mxu0 0.0
        %905 = vmatprep.subr.mxu0 0.0
        %906 = vmatpush1.msra.mxu0 0.0
        %907 = vmatprep.subr.mxu0 0.0
        %908 = vmatpush1.msra.mxu0 0.0
        %909 = vmatprep.subr.mxu0 0.0
        %910 = vmatpush1.msra.mxu0 0.0
        %911 = vmatprep.subr.mxu0 0.0
        %912 = vmatpush1.msra.mxu0 0.0
        %913 = vmatprep.subr.mxu0 0.0
        %914 = vmatpush1.msra.mxu0 0.0
        %915 = vmatprep.subr.mxu0 0.0
        %916 = vmatpush1.msra.mxu0 0.0
        %917 = vmatprep.subr.mxu0 0.0
        %918 = vmatpush1.msra.mxu0 0.0
        %919 = vmatprep.subr.mxu0 0.0
        %920 = vmatpush1.msra.mxu0 0.0
        %921 = vmatprep.subr.mxu0 0.0
        %922 = vmatpush1.msra.mxu0 0.0
        %923 = vmatprep.subr.mxu0 0.0
        %924 = vmatpush1.msra.mxu0 %v799
        %925 = vmatprep.subr.mxu0 0.0
        %926 = vmatpush2.msra.mxu0 0.0
        %927 = vmatprep.subr.mxu0 0.0
        %928 = vmatpush2.msra.mxu0 0.0
        %929 = vmatprep.subr.mxu0 0.0
        %930 = vmatpush2.msra.mxu0 0.0
        %931 = vmatprep.subr.mxu0 0.0
        %932 = vmatpush2.msra.mxu0 0.0
        %933 = vmatprep.subr.mxu0 0.0
        %934 = vmatpush2.msra.mxu0 0.0
        %935 = vmatprep.subr.mxu0 0.0
        %936 = vmatpush2.msra.mxu0 0.0
        %937 = vmatprep.subr.mxu0 0.0
        %938 = vmatpush2.msra.mxu0 0.0
        %939 = vmatprep.subr.mxu0 0.0
        %940 = vmatpush2.msra.mxu0 0.0
        %941 = vmatprep.subr.mxu0 0.0
        %942 = vmatpush2.msra.mxu0 0.0
        %943 = vmatprep.subr.mxu0 0.0
        %944 = vmatpush2.msra.mxu0 0.0
        %945 = vmatprep.subr.mxu0 0.0
        %946 = vmatpush2.msra.mxu0 0.0
        %947 = vmatprep.subr.mxu0 0.0
        %948 = vmatpush2.msra.mxu0 0.0
        %949 = vmatprep.subr.mxu0 0.0
        %950 = vmatpush2.msra.mxu0 0.0
        %951 = vmatprep.subr.mxu0 0.0
        %952 = vmatpush2.msra.mxu0 0.0
        %953 = vmatprep.subr.mxu0 0.0
        %954 = vmatpush2.msra.mxu0 0.0
        %955 = vmatprep.subr.mxu0 0.0
        %956 = vmatpush2.msra.mxu0 0.0
        %957 = vmatprep.mubr.f32.mxu0 0.0
        %958 = vmatmul.mubr.f32.gmra.mxu0 %v891
        %v959 = vpop.f32.mrf.mxu0
        %v960 = vadd.f32 0.0, %v959
        %v961 = vpop.f32.mrf.mxu0
        %962 = vdwg.mxu0
        %v963 = vrcp.pop %v889
        %v964 = vmul.f32 %v960, %v963
        %965 = vst.msk [vmem:[#allocation2] sm:$0xff] %vm804, %v964
        %966 = vrot.lane.b32.xlu0 %v685, 120
        %v967 = vpop.permute.xlu0 %966
        %968 = vrot.lane.b32.xlu0 %v740, 120
        %v969 = vpop.permute.xlu0 %968
        %v970 = vsel %vm804, %v967, 0
        %v972 = vsel %vm804, %v969, 0
        %974 = vmatprep.subr.mxu0 0.0
        %975 = vmatpush1.xpose.msra.mxu0 0.0
        %976 = vmatprep.subr.mxu0 0.0
        %977 = vmatpush1.xpose.msra.mxu0 0.0
        %978 = vmatprep.subr.mxu0 0.0
        %979 = vmatpush1.xpose.msra.mxu0 0.0
        %980 = vmatprep.subr.mxu0 0.0
        %981 = vmatpush1.xpose.msra.mxu0 0.0
        %982 = vmatprep.subr.mxu0 0.0
        %983 = vmatpush1.xpose.msra.mxu0 0.0
        %984 = vmatprep.subr.mxu0 0.0
        %985 = vmatpush1.xpose.msra.mxu0 0.0
        %986 = vmatprep.subr.mxu0 0.0
        %987 = vmatpush1.xpose.msra.mxu0 0.0
        %988 = vmatprep.subr.mxu0 0.0
        %989 = vmatpush1.xpose.msra.mxu0 0.0
        %990 = vmatprep.subr.mxu0 0.0
        %991 = vmatpush1.xpose.msra.mxu0 0.0
        %992 = vmatprep.subr.mxu0 0.0
        %993 = vmatpush1.xpose.msra.mxu0 0.0
        %994 = vmatprep.subr.mxu0 0.0
        %995 = vmatpush1.xpose.msra.mxu0 0.0
        %996 = vmatprep.subr.mxu0 0.0
        %997 = vmatpush1.xpose.msra.mxu0 0.0
        %998 = vmatprep.subr.mxu0 0.0
        %999 = vmatpush1.xpose.msra.mxu0 0.0
        %1000 = vmatprep.subr.mxu0 0.0
        %1001 = vmatpush1.xpose.msra.mxu0 0.0
        %1002 = vmatprep.subr.mxu0 0.0
        %1003 = vmatpush1.xpose.msra.mxu0 0.0
        %1004 = vmatprep.subr.mxu0 0.0
        %1005 = vmatpush1.xpose.msra.mxu0 %v972
        %1006 = vmatprep.subr.mxu0 0.0
        %1007 = vmatpush2.xpose.msra.mxu0 0.0
        %1008 = vmatprep.subr.mxu0 0.0
        %1009 = vmatpush2.xpose.msra.mxu0 0.0
        %1010 = vmatprep.subr.mxu0 0.0
        %1011 = vmatpush2.xpose.msra.mxu0 0.0
        %1012 = vmatprep.subr.mxu0 0.0
        %1013 = vmatpush2.xpose.msra.mxu0 0.0
        %1014 = vmatprep.subr.mxu0 0.0
        %1015 = vmatpush2.xpose.msra.mxu0 0.0
        %1016 = vmatprep.subr.mxu0 0.0
        %1017 = vmatpush2.xpose.msra.mxu0 0.0
        %1018 = vmatprep.subr.mxu0 0.0
        %1019 = vmatpush2.xpose.msra.mxu0 0.0
        %1020 = vmatprep.subr.mxu0 0.0
        %1021 = vmatpush2.xpose.msra.mxu0 0.0
        %1022 = vmatprep.subr.mxu0 0.0
        %1023 = vmatpush2.xpose.msra.mxu0 0.0
        %1024 = vmatprep.subr.mxu0 0.0
        %1025 = vmatpush2.xpose.msra.mxu0 0.0
        %1026 = vmatprep.subr.mxu0 0.0
        %1027 = vmatpush2.xpose.msra.mxu0 0.0
        %1028 = vmatprep.subr.mxu0 0.0
        %1029 = vmatpush2.xpose.msra.mxu0 0.0
        %1030 = vmatprep.subr.mxu0 0.0
        %1031 = vmatpush2.xpose.msra.mxu0 0.0
        %1032 = vmatprep.subr.mxu0 0.0
        %1033 = vmatpush2.xpose.msra.mxu0 0.0
        %1034 = vmatprep.subr.mxu0 0.0
        %1035 = vmatpush2.xpose.msra.mxu0 0.0
        %1036 = vmatprep.subr.mxu0 0.0
        %1037 = vmatpush2.xpose.msra.mxu0 0.0
        %1038 = vmatprep.mubr.f32.mxu0 0.0
        %1039 = vmatmul.mubr.f32.gmra.mxu0 %v970
        %v1040 = vpop.f32.mrf.mxu0
        %v1041 = vadd.f32 0.0, %v1040
        %v1042 = vpop.f32.mrf.mxu0
        %1043 = vdwg.mxu0
        %v1044 = vsel %vm804, %v1041, -inf
        %1045 = vmax.xlane.f32.xlu0 %v1044
        %v1046 = vpop.xlane.xlu0 %1045
        %v1047 = vsub.f32 %v1041, %v1046
        %v1048 = vmul.f32 %v1047, 1.442695
        %v1049 = vpow.pop %v1048
        %v1050 = vsel %vm804, %v1049, 0.0
        %1051 = vadd.xlane.f32.xlu0 %v1050
        %v1052 = vpop.xlane.xlu0 %1051
        %1054 = vrot.lane.b32.xlu0 %v799, 120
        %v1055 = vpop.permute.xlu0 %1054
        %v1058 = vsel %vm804, %v1049, 0
        %1060 = vmatprep.subr.mxu0 0.0
        %1061 = vmatpush1.msra.mxu0 0.0
        %1062 = vmatprep.subr.mxu0 0.0
        %1063 = vmatpush1.msra.mxu0 0.0
        %1064 = vmatprep.subr.mxu0 0.0
        %1065 = vmatpush1.msra.mxu0 0.0
        %1066 = vmatprep.subr.mxu0 0.0
        %1067 = vmatpush1.msra.mxu0 0.0
        %1068 = vmatprep.subr.mxu0 0.0
        %1069 = vmatpush1.msra.mxu0 0.0
        %1070 = vmatprep.subr.mxu0 0.0
        %1071 = vmatpush1.msra.mxu0 0.0
        %1072 = vmatprep.subr.mxu0 0.0
        %1073 = vmatpush1.msra.mxu0 0.0
        %1074 = vmatprep.subr.mxu0 0.0
        %1075 = vmatpush1.msra.mxu0 0.0
        %1076 = vmatprep.subr.mxu0 0.0
        %1077 = vmatpush1.msra.mxu0 0.0
        %1078 = vmatprep.subr.mxu0 0.0
        %1079 = vmatpush1.msra.mxu0 0.0
        %1080 = vmatprep.subr.mxu0 0.0
        %1081 = vmatpush1.msra.mxu0 0.0
        %1082 = vmatprep.subr.mxu0 0.0
        %1083 = vmatpush1.msra.mxu0 0.0
        %1084 = vmatprep.subr.mxu0 0.0
        %1085 = vmatpush1.msra.mxu0 0.0
        %1086 = vmatprep.subr.mxu0 0.0
        %1087 = vmatpush1.msra.mxu0 0.0
        %1088 = vmatprep.subr.mxu0 0.0
        %1089 = vmatpush1.msra.mxu0 0.0
        %1090 = vmatprep.subr.mxu0 0.0
        %1091 = vmatpush1.msra.mxu0 %v1055
        %1092 = vmatprep.subr.mxu0 0.0
        %1093 = vmatpush2.msra.mxu0 0.0
        %1094 = vmatprep.subr.mxu0 0.0
        %1095 = vmatpush2.msra.mxu0 0.0
        %1096 = vmatprep.subr.mxu0 0.0
        %1097 = vmatpush2.msra.mxu0 0.0
        %1098 = vmatprep.subr.mxu0 0.0
        %1099 = vmatpush2.msra.mxu0 0.0
        %1100 = vmatprep.subr.mxu0 0.0
        %1101 = vmatpush2.msra.mxu0 0.0
        %1102 = vmatprep.subr.mxu0 0.0
        %1103 = vmatpush2.msra.mxu0 0.0
        %1104 = vmatprep.subr.mxu0 0.0
        %1105 = vmatpush2.msra.mxu0 0.0
        %1106 = vmatprep.subr.mxu0 0.0
        %1107 = vmatpush2.msra.mxu0 0.0
        %1108 = vmatprep.subr.mxu0 0.0
        %1109 = vmatpush2.msra.mxu0 0.0
        %1110 = vmatprep.subr.mxu0 0.0
        %1111 = vmatpush2.msra.mxu0 0.0
        %1112 = vmatprep.subr.mxu0 0.0
        %1113 = vmatpush2.msra.mxu0 0.0
        %1114 = vmatprep.subr.mxu0 0.0
        %1115 = vmatpush2.msra.mxu0 0.0
        %1116 = vmatprep.subr.mxu0 0.0
        %1117 = vmatpush2.msra.mxu0 0.0
        %1118 = vmatprep.subr.mxu0 0.0
        %1119 = vmatpush2.msra.mxu0 0.0
        %1120 = vmatprep.subr.mxu0 0.0
        %1121 = vmatpush2.msra.mxu0 0.0
        %1122 = vmatprep.subr.mxu0 0.0
        %1123 = vmatpush2.msra.mxu0 0.0
        %1124 = vmatprep.mubr.f32.mxu0 0.0
        %1125 = vmatmul.mubr.f32.gmra.mxu0 %v1058
        %v1126 = vpop.f32.mrf.mxu0
        %v1127 = vadd.f32 0.0, %v1126
        %v1128 = vpop.f32.mrf.mxu0
        %1129 = vdwg.mxu0
        %v1130 = vrcp.pop %v1052
        %v1131 = vmul.f32 %v1127, %v1130
        %1133 = vrot.lane.b32.xlu0 %v1131, 8
        %v1134 = vpop.permute.xlu0 %1133
        %vm1136 = vcmask 130112
        %1137 = vst.msk [vmem:[#allocation2] sm:$0xff] %vm1136, %v1134
        %1138 = vrot.lane.b32.xlu0 %v685, 112
        %v1139 = vpop.permute.xlu0 %1138
        %1140 = vrot.lane.b32.xlu0 %v740, 112
        %v1141 = vpop.permute.xlu0 %1140
        %v1142 = vsel %vm804, %v1139, 0
        %v1144 = vsel %vm804, %v1141, 0
        %1146 = vmatprep.subr.mxu0 0.0
        %1147 = vmatpush1.xpose.msra.mxu0 0.0
        %1148 = vmatprep.subr.mxu0 0.0
        %1149 = vmatpush1.xpose.msra.mxu0 0.0
        %1150 = vmatprep.subr.mxu0 0.0
        %1151 = vmatpush1.xpose.msra.mxu0 0.0
        %1152 = vmatprep.subr.mxu0 0.0
        %1153 = vmatpush1.xpose.msra.mxu0 0.0
        %1154 = vmatprep.subr.mxu0 0.0
        %1155 = vmatpush1.xpose.msra.mxu0 0.0
        %1156 = vmatprep.subr.mxu0 0.0
        %1157 = vmatpush1.xpose.msra.mxu0 0.0
        %1158 = vmatprep.subr.mxu0 0.0
        %1159 = vmatpush1.xpose.msra.mxu0 0.0
        %1160 = vmatprep.subr.mxu0 0.0
        %1161 = vmatpush1.xpose.msra.mxu0 0.0
        %1162 = vmatprep.subr.mxu0 0.0
        %1163 = vmatpush1.xpose.msra.mxu0 0.0
        %1164 = vmatprep.subr.mxu0 0.0
        %1165 = vmatpush1.xpose.msra.mxu0 0.0
        %1166 = vmatprep.subr.mxu0 0.0
        %1167 = vmatpush1.xpose.msra.mxu0 0.0
        %1168 = vmatprep.subr.mxu0 0.0
        %1169 = vmatpush1.xpose.msra.mxu0 0.0
        %1170 = vmatprep.subr.mxu0 0.0
        %1171 = vmatpush1.xpose.msra.mxu0 0.0
        %1172 = vmatprep.subr.mxu0 0.0
        %1173 = vmatpush1.xpose.msra.mxu0 0.0
        %1174 = vmatprep.subr.mxu0 0.0
        %1175 = vmatpush1.xpose.msra.mxu0 0.0
        %1176 = vmatprep.subr.mxu0 0.0
        %1177 = vmatpush1.xpose.msra.mxu0 %v1144
        %1178 = vmatprep.subr.mxu0 0.0
        %1179 = vmatpush2.xpose.msra.mxu0 0.0
        %1180 = vmatprep.subr.mxu0 0.0
        %1181 = vmatpush2.xpose.msra.mxu0 0.0
        %1182 = vmatprep.subr.mxu0 0.0
        %1183 = vmatpush2.xpose.msra.mxu0 0.0
        %1184 = vmatprep.subr.mxu0 0.0
        %1185 = vmatpush2.xpose.msra.mxu0 0.0
        %1186 = vmatprep.subr.mxu0 0.0
        %1187 = vmatpush2.xpose.msra.mxu0 0.0
        %1188 = vmatprep.subr.mxu0 0.0
        %1189 = vmatpush2.xpose.msra.mxu0 0.0
        %1190 = vmatprep.subr.mxu0 0.0
        %1191 = vmatpush2.xpose.msra.mxu0 0.0
        %1192 = vmatprep.subr.mxu0 0.0
        %1193 = vmatpush2.xpose.msra.mxu0 0.0
        %1194 = vmatprep.subr.mxu0 0.0
        %1195 = vmatpush2.xpose.msra.mxu0 0.0
        %1196 = vmatprep.subr.mxu0 0.0
        %1197 = vmatpush2.xpose.msra.mxu0 0.0
        %1198 = vmatprep.subr.mxu0 0.0
        %1199 = vmatpush2.xpose.msra.mxu0 0.0
        %1200 = vmatprep.subr.mxu0 0.0
        %1201 = vmatpush2.xpose.msra.mxu0 0.0
        %1202 = vmatprep.subr.mxu0 0.0
        %1203 = vmatpush2.xpose.msra.mxu0 0.0
        %1204 = vmatprep.subr.mxu0 0.0
        %1205 = vmatpush2.xpose.msra.mxu0 0.0
        %1206 = vmatprep.subr.mxu0 0.0
        %1207 = vmatpush2.xpose.msra.mxu0 0.0
        %1208 = vmatprep.subr.mxu0 0.0
        %1209 = vmatpush2.xpose.msra.mxu0 0.0
        %1210 = vmatprep.mubr.f32.mxu0 0.0
        %1211 = vmatmul.mubr.f32.gmra.mxu0 %v1142
        %v1212 = vpop.f32.mrf.mxu0
        %v1213 = vadd.f32 0.0, %v1212
        %v1214 = vpop.f32.mrf.mxu0
        %1215 = vdwg.mxu0
        %v1216 = vsel %vm804, %v1213, -inf
        %1217 = vmax.xlane.f32.xlu0 %v1216
        %v1218 = vpop.xlane.xlu0 %1217
        %v1219 = vsub.f32 %v1213, %v1218
        %v1220 = vmul.f32 %v1219, 1.442695
        %v1221 = vpow.pop %v1220
        %v1222 = vsel %vm804, %v1221, 0.0
        %1223 = vadd.xlane.f32.xlu0 %v1222
        %v1224 = vpop.xlane.xlu0 %1223
        %1225 = vrot.lane.b32.xlu0 %v799, 112
        %v1226 = vpop.permute.xlu0 %1225
        %v1229 = vsel %vm804, %v1221, 0
        %1231 = vmatprep.subr.mxu0 0.0
        %1232 = vmatpush1.msra.mxu0 0.0
        %1233 = vmatprep.subr.mxu0 0.0
        %1234 = vmatpush1.msra.mxu0 0.0
        %1235 = vmatprep.subr.mxu0 0.0
        %1236 = vmatpush1.msra.mxu0 0.0
        %1237 = vmatprep.subr.mxu0 0.0
        %1238 = vmatpush1.msra.mxu0 0.0
        %1239 = vmatprep.subr.mxu0 0.0
        %1240 = vmatpush1.msra.mxu0 0.0
        %1241 = vmatprep.subr.mxu0 0.0
        %1242 = vmatpush1.msra.mxu0 0.0
        %1243 = vmatprep.subr.mxu0 0.0
        %1244 = vmatpush1.msra.mxu0 0.0
        %1245 = vmatprep.subr.mxu0 0.0
        %1246 = vmatpush1.msra.mxu0 0.0
        %1247 = vmatprep.subr.mxu0 0.0
        %1248 = vmatpush1.msra.mxu0 0.0
        %1249 = vmatprep.subr.mxu0 0.0
        %1250 = vmatpush1.msra.mxu0 0.0
        %1251 = vmatprep.subr.mxu0 0.0
        %1252 = vmatpush1.msra.mxu0 0.0
        %1253 = vmatprep.subr.mxu0 0.0
        %1254 = vmatpush1.msra.mxu0 0.0
        %1255 = vmatprep.subr.mxu0 0.0
        %1256 = vmatpush1.msra.mxu0 0.0
        %1257 = vmatprep.subr.mxu0 0.0
        %1258 = vmatpush1.msra.mxu0 0.0
        %1259 = vmatprep.subr.mxu0 0.0
        %1260 = vmatpush1.msra.mxu0 0.0
        %1261 = vmatprep.subr.mxu0 0.0
        %1262 = vmatpush1.msra.mxu0 %v1226
        %1263 = vmatprep.subr.mxu0 0.0
        %1264 = vmatpush2.msra.mxu0 0.0
        %1265 = vmatprep.subr.mxu0 0.0
        %1266 = vmatpush2.msra.mxu0 0.0
        %1267 = vmatprep.subr.mxu0 0.0
        %1268 = vmatpush2.msra.mxu0 0.0
        %1269 = vmatprep.subr.mxu0 0.0
        %1270 = vmatpush2.msra.mxu0 0.0
        %1271 = vmatprep.subr.mxu0 0.0
        %1272 = vmatpush2.msra.mxu0 0.0
        %1273 = vmatprep.subr.mxu0 0.0
        %1274 = vmatpush2.msra.mxu0 0.0
        %1275 = vmatprep.subr.mxu0 0.0
        %1276 = vmatpush2.msra.mxu0 0.0
        %1277 = vmatprep.subr.mxu0 0.0
        %1278 = vmatpush2.msra.mxu0 0.0
        %1279 = vmatprep.subr.mxu0 0.0
        %1280 = vmatpush2.msra.mxu0 0.0
        %1281 = vmatprep.subr.mxu0 0.0
        %1282 = vmatpush2.msra.mxu0 0.0
        %1283 = vmatprep.subr.mxu0 0.0
        %1284 = vmatpush2.msra.mxu0 0.0
        %1285 = vmatprep.subr.mxu0 0.0
        %1286 = vmatpush2.msra.mxu0 0.0
        %1287 = vmatprep.subr.mxu0 0.0
        %1288 = vmatpush2.msra.mxu0 0.0
        %1289 = vmatprep.subr.mxu0 0.0
        %1290 = vmatpush2.msra.mxu0 0.0
        %1291 = vmatprep.subr.mxu0 0.0
        %1292 = vmatpush2.msra.mxu0 0.0
        %1293 = vmatprep.subr.mxu0 0.0
        %1294 = vmatpush2.msra.mxu0 0.0
        %1295 = vmatprep.mubr.f32.mxu0 0.0
        %1296 = vmatmul.mubr.f32.gmra.mxu0 %v1229
        %v1297 = vpop.f32.mrf.mxu0
        %v1298 = vadd.f32 0.0, %v1297
        %v1299 = vpop.f32.mrf.mxu0
        %1300 = vdwg.mxu0
        %v1301 = vrcp.pop %v1224
        %v1302 = vmul.f32 %v1298, %v1301
        %1304 = vrot.lane.b32.xlu0 %v1302, 16
        %v1305 = vpop.permute.xlu0 %1304
        %vm1307 = vcmask 195712
        %1308 = vst.msk [vmem:[#allocation2] sm:$0xff] %vm1307, %v1305
        %1309 = vrot.lane.b32.xlu0 %v685, 104
        %v1310 = vpop.permute.xlu0 %1309
        %1311 = vrot.lane.b32.xlu0 %v740, 104
        %v1312 = vpop.permute.xlu0 %1311
        %v1313 = vsel %vm804, %v1310, 0
        %v1315 = vsel %vm804, %v1312, 0
        %1317 = vmatprep.subr.mxu0 0.0
        %1318 = vmatpush1.xpose.msra.mxu0 0.0
        %1319 = vmatprep.subr.mxu0 0.0
        %1320 = vmatpush1.xpose.msra.mxu0 0.0
        %1321 = vmatprep.subr.mxu0 0.0
        %1322 = vmatpush1.xpose.msra.mxu0 0.0
        %1323 = vmatprep.subr.mxu0 0.0
        %1324 = vmatpush1.xpose.msra.mxu0 0.0
        %1325 = vmatprep.subr.mxu0 0.0
        %1326 = vmatpush1.xpose.msra.mxu0 0.0
        %1327 = vmatprep.subr.mxu0 0.0
        %1328 = vmatpush1.xpose.msra.mxu0 0.0
        %1329 = vmatprep.subr.mxu0 0.0
        %1330 = vmatpush1.xpose.msra.mxu0 0.0
        %1331 = vmatprep.subr.mxu0 0.0
        %1332 = vmatpush1.xpose.msra.mxu0 0.0
        %1333 = vmatprep.subr.mxu0 0.0
        %1334 = vmatpush1.xpose.msra.mxu0 0.0
        %1335 = vmatprep.subr.mxu0 0.0
        %1336 = vmatpush1.xpose.msra.mxu0 0.0
        %1337 = vmatprep.subr.mxu0 0.0
        %1338 = vmatpush1.xpose.msra.mxu0 0.0
        %1339 = vmatprep.subr.mxu0 0.0
        %1340 = vmatpush1.xpose.msra.mxu0 0.0
        %1341 = vmatprep.subr.mxu0 0.0
        %1342 = vmatpush1.xpose.msra.mxu0 0.0
        %1343 = vmatprep.subr.mxu0 0.0
        %1344 = vmatpush1.xpose.msra.mxu0 0.0
        %1345 = vmatprep.subr.mxu0 0.0
        %1346 = vmatpush1.xpose.msra.mxu0 0.0
        %1347 = vmatprep.subr.mxu0 0.0
        %1348 = vmatpush1.xpose.msra.mxu0 %v1315
        %1349 = vmatprep.subr.mxu0 0.0
        %1350 = vmatpush2.xpose.msra.mxu0 0.0
        %1351 = vmatprep.subr.mxu0 0.0
        %1352 = vmatpush2.xpose.msra.mxu0 0.0
        %1353 = vmatprep.subr.mxu0 0.0
        %1354 = vmatpush2.xpose.msra.mxu0 0.0
        %1355 = vmatprep.subr.mxu0 0.0
        %1356 = vmatpush2.xpose.msra.mxu0 0.0
        %1357 = vmatprep.subr.mxu0 0.0
        %1358 = vmatpush2.xpose.msra.mxu0 0.0
        %1359 = vmatprep.subr.mxu0 0.0
        %1360 = vmatpush2.xpose.msra.mxu0 0.0
        %1361 = vmatprep.subr.mxu0 0.0
        %1362 = vmatpush2.xpose.msra.mxu0 0.0
        %1363 = vmatprep.subr.mxu0 0.0
        %1364 = vmatpush2.xpose.msra.mxu0 0.0
        %1365 = vmatprep.subr.mxu0 0.0
        %1366 = vmatpush2.xpose.msra.mxu0 0.0
        %1367 = vmatprep.subr.mxu0 0.0
        %1368 = vmatpush2.xpose.msra.mxu0 0.0
        %1369 = vmatprep.subr.mxu0 0.0
        %1370 = vmatpush2.xpose.msra.mxu0 0.0
        %1371 = vmatprep.subr.mxu0 0.0
        %1372 = vmatpush2.xpose.msra.mxu0 0.0
        %1373 = vmatprep.subr.mxu0 0.0
        %1374 = vmatpush2.xpose.msra.mxu0 0.0
        %1375 = vmatprep.subr.mxu0 0.0
        %1376 = vmatpush2.xpose.msra.mxu0 0.0
        %1377 = vmatprep.subr.mxu0 0.0
        %1378 = vmatpush2.xpose.msra.mxu0 0.0
        %1379 = vmatprep.subr.mxu0 0.0
        %1380 = vmatpush2.xpose.msra.mxu0 0.0
        %1381 = vmatprep.mubr.f32.mxu0 0.0
        %1382 = vmatmul.mubr.f32.gmra.mxu0 %v1313
        %v1383 = vpop.f32.mrf.mxu0
        %v1384 = vadd.f32 0.0, %v1383
        %v1385 = vpop.f32.mrf.mxu0
        %1386 = vdwg.mxu0
        %v1387 = vsel %vm804, %v1384, -inf
        %1388 = vmax.xlane.f32.xlu0 %v1387
        %v1389 = vpop.xlane.xlu0 %1388
        %v1390 = vsub.f32 %v1384, %v1389
        %v1391 = vmul.f32 %v1390, 1.442695
        %v1392 = vpow.pop %v1391
        %v1393 = vsel %vm804, %v1392, 0.0
        %1394 = vadd.xlane.f32.xlu0 %v1393
        %v1395 = vpop.xlane.xlu0 %1394
        %1396 = vrot.lane.b32.xlu0 %v799, 104
        %v1397 = vpop.permute.xlu0 %1396
        %v1400 = vsel %vm804, %v1392, 0
        %1402 = vmatprep.subr.mxu0 0.0
        %1403 = vmatpush1.msra.mxu0 0.0
        %1404 = vmatprep.subr.mxu0 0.0
        %1405 = vmatpush1.msra.mxu0 0.0
        %1406 = vmatprep.subr.mxu0 0.0
        %1407 = vmatpush1.msra.mxu0 0.0
        %1408 = vmatprep.subr.mxu0 0.0
        %1409 = vmatpush1.msra.mxu0 0.0
        %1410 = vmatprep.subr.mxu0 0.0
        %1411 = vmatpush1.msra.mxu0 0.0
        %1412 = vmatprep.subr.mxu0 0.0
        %1413 = vmatpush1.msra.mxu0 0.0
        %1414 = vmatprep.subr.mxu0 0.0
        %1415 = vmatpush1.msra.mxu0 0.0
        %1416 = vmatprep.subr.mxu0 0.0
        %1417 = vmatpush1.msra.mxu0 0.0
        %1418 = vmatprep.subr.mxu0 0.0
        %1419 = vmatpush1.msra.mxu0 0.0
        %1420 = vmatprep.subr.mxu0 0.0
        %1421 = vmatpush1.msra.mxu0 0.0
        %1422 = vmatprep.subr.mxu0 0.0
        %1423 = vmatpush1.msra.mxu0 0.0
        %1424 = vmatprep.subr.mxu0 0.0
        %1425 = vmatpush1.msra.mxu0 0.0
        %1426 = vmatprep.subr.mxu0 0.0
        %1427 = vmatpush1.msra.mxu0 0.0
        %1428 = vmatprep.subr.mxu0 0.0
        %1429 = vmatpush1.msra.mxu0 0.0
        %1430 = vmatprep.subr.mxu0 0.0
        %1431 = vmatpush1.msra.mxu0 0.0
        %1432 = vmatprep.subr.mxu0 0.0
        %1433 = vmatpush1.msra.mxu0 %v1397
        %1434 = vmatprep.subr.mxu0 0.0
        %1435 = vmatpush2.msra.mxu0 0.0
        %1436 = vmatprep.subr.mxu0 0.0
        %1437 = vmatpush2.msra.mxu0 0.0
        %1438 = vmatprep.subr.mxu0 0.0
        %1439 = vmatpush2.msra.mxu0 0.0
        %1440 = vmatprep.subr.mxu0 0.0
        %1441 = vmatpush2.msra.mxu0 0.0
        %1442 = vmatprep.subr.mxu0 0.0
        %1443 = vmatpush2.msra.mxu0 0.0
        %1444 = vmatprep.subr.mxu0 0.0
        %1445 = vmatpush2.msra.mxu0 0.0
        %1446 = vmatprep.subr.mxu0 0.0
        %1447 = vmatpush2.msra.mxu0 0.0
        %1448 = vmatprep.subr.mxu0 0.0
        %1449 = vmatpush2.msra.mxu0 0.0
        %1450 = vmatprep.subr.mxu0 0.0
        %1451 = vmatpush2.msra.mxu0 0.0
        %1452 = vmatprep.subr.mxu0 0.0
        %1453 = vmatpush2.msra.mxu0 0.0
        %1454 = vmatprep.subr.mxu0 0.0
        %1455 = vmatpush2.msra.mxu0 0.0
        %1456 = vmatprep.subr.mxu0 0.0
        %1457 = vmatpush2.msra.mxu0 0.0
        %1458 = vmatprep.subr.mxu0 0.0
        %1459 = vmatpush2.msra.mxu0 0.0
        %1460 = vmatprep.subr.mxu0 0.0
        %1461 = vmatpush2.msra.mxu0 0.0
        %1462 = vmatprep.subr.mxu0 0.0
        %1463 = vmatpush2.msra.mxu0 0.0
        %1464 = vmatprep.subr.mxu0 0.0
        %1465 = vmatpush2.msra.mxu0 0.0
        %1466 = vmatprep.mubr.f32.mxu0 0.0
        %1467 = vmatmul.mubr.f32.gmra.mxu0 %v1400
        %v1468 = vpop.f32.mrf.mxu0
        %v1469 = vadd.f32 0.0, %v1468
        %v1470 = vpop.f32.mrf.mxu0
        %1471 = vdwg.mxu0
        %v1472 = vrcp.pop %v1395
        %v1473 = vmul.f32 %v1469, %v1472
        %1475 = vrot.lane.b32.xlu0 %v1473, 24
        %v1476 = vpop.permute.xlu0 %1475
        %vm1478 = vcmask 261312
        %1479 = vst.msk [vmem:[#allocation2] sm:$0xff] %vm1478, %v1476
        %v1480 = vld [vmem:[#allocation2] sm:$0xff]
        %v1481 = vpack.c.bf16 %v1480, %v1480
        %v1482 = vld [vmem:[#allocation9] sm:$0xf]
        %v1483 = vld [vmem:[#allocation9 + $0x4] sm:$0xf]
        %v1484 = vld [vmem:[#allocation9 + $0x8] sm:$0xf]
        %v1485 = vld [vmem:[#allocation9 + $0xc] sm:$0xf]
        %v1490 = vunpack.c.l.b16 %v1482
        %v1491 = vunpack.c.l.b16 %v1483
        %v1492 = vunpack.c.l.b16 %v1484
        %v1493 = vunpack.c.l.b16 %v1485
        %v1494 = vpack.c.b16 %v1491, %v1490
        %v1495 = vpack.c.b16 %v1493, %v1492
        %v1499 = vsel %vm641, %v1481, 0
        %1501 = vmatprep.subr.bf16.mxu0 0
        %1502 = vmatpush1.bf16.msra.mxu0 0
        %1503 = vmatprep.subr.bf16.mxu0 0
        %1504 = vmatpush1.bf16.msra.mxu0 0
        %1505 = vmatprep.subr.bf16.mxu0 0
        %1506 = vmatpush1.bf16.msra.mxu0 0
        %1507 = vmatprep.subr.bf16.mxu0 0
        %1508 = vmatpush1.bf16.msra.mxu0 0
        %1509 = vmatprep.subr.bf16.mxu0 0
        %1510 = vmatpush1.bf16.msra.mxu0 0
        %1511 = vmatprep.subr.bf16.mxu0 0
        %1512 = vmatpush1.bf16.msra.mxu0 0
        %1513 = vmatprep.subr.bf16.mxu0 0
        %1514 = vmatpush1.bf16.msra.mxu0 %v1495
        %1515 = vmatprep.subr.bf16.mxu0 0
        %1516 = vmatpush1.bf16.msra.mxu0 %v1494
        %1517 = vmatprep.subr.bf16.mxu0 0
        %1518 = vmatpush2.bf16.msra.mxu0 0
        %1519 = vmatprep.subr.bf16.mxu0 0
        %1520 = vmatpush2.bf16.msra.mxu0 0
        %1521 = vmatprep.subr.bf16.mxu0 0
        %1522 = vmatpush2.bf16.msra.mxu0 0
        %1523 = vmatprep.subr.bf16.mxu0 0
        %1524 = vmatpush2.bf16.msra.mxu0 0
        %1525 = vmatprep.subr.bf16.mxu0 0
        %1526 = vmatpush2.bf16.msra.mxu0 0
        %1527 = vmatprep.subr.bf16.mxu0 0
        %1528 = vmatpush2.bf16.msra.mxu0 0
        %1529 = vmatprep.subr.bf16.mxu0 0
        %1530 = vmatpush2.bf16.msra.mxu0 0
        %1531 = vmatprep.subr.bf16.mxu0 0
        %1532 = vmatpush2.bf16.msra.mxu0 0
        %1533 = vmatprep.mubr.bf16.mxu0 0
        %1534 = vmatmul.mubr.bf16.gmra.mxu0 %v1499
        %v1535 = vpop.f32.mrf.mxu0
        %v1536 = vadd.f32 0.0, %v1535
        %v1537 = vpop.f32.mrf.mxu0
        %v1538 = vpop.f32.mrf.mxu0
        %v1539 = vpop.f32.mrf.mxu0
        %1540 = vdwg.mxu0
        %v1541 = vunpack.c.l.bf16 %v622
        %v1542 = vadd.f32 %v1541, %v1536
        %v1543 = vld [vmem:[#allocation11] sm:$0x1]
        %v1544 = vld [vmem:[#allocation12] sm:$0x1]
        %v1545 = vsel %vm641, %v1542, 0.0
        %1546 = vadd.xlane.f32.xlu0 %v1545
        %v1547 = vpop.xlane.xlu0 %1546
        %v1548 = vrcp.pop 32.0
        %v1549 = vmul.f32 %v1547, %v1548
        %v1550 = vsub.f32 %v1542, %v1549
        %v1551 = vmul.f32 %v1550, %v1550
        %v1552 = vsel %vm641, %v1551, 0.0
        %1553 = vadd.xlane.f32.xlu0 %v1552
        %v1554 = vpop.xlane.xlu0 %1553
        %v1555 = vmul.f32 %v1554, %v1548
        %v1556 = vadd.f32 %v1555, 1e-05
        %v1557 = vrsqrt.pop %v1556
        %v1558 = vmul.f32 %v1550, %v1557
        %v1560 = vlaneseq
        %v1561 = vshrl.u32 %v1560, 7
        %v1562 = vsub.s32 0, %v1561
        %v1563 = vrot.slane %v1543, %v1562
        %v1565 = vmul.f32 %v1558, %v1563
        %v1567 = vlaneseq
        %v1568 = vshrl.u32 %v1567, 7
        %v1569 = vsub.s32 0, %v1568
        %v1570 = vrot.slane %v1544, %v1569
        %v1572 = vadd.f32 %v1565, %v1570
        %v1573 = vpack.c.bf16 %v1572, %v1572
        %v1574 = vld [vmem:[%s9] sm:$0xf]
        %v1575 = vld [vmem:[%s9 + $0x4] sm:$0xf]
        %v1576 = vld [vmem:[%s9 + $0x8] sm:$0xf]
        %v1577 = vld [vmem:[%s9 + $0xc] sm:$0xf]
        %v1578 = vld [vmem:[%s10] sm:$0x1]
        %v1580 = vlaneseq
        %v1581 = vshrl.u32 %v1580, 7
        %v1582 = vsub.s32 0, %v1581
        %v1583 = vrot.slane %v1578, %v1582
        %v1589 = vunpack.c.l.b16 %v1574
        %v1590 = vunpack.c.l.b16 %v1575
        %v1591 = vunpack.c.l.b16 %v1576
        %v1592 = vunpack.c.l.b16 %v1577
        %v1593 = vpack.c.b16 %v1590, %v1589
        %v1594 = vpack.c.b16 %v1592, %v1591
        %v1598 = vsel %vm641, %v1573, 0
        %1600 = vmatprep.subr.bf16.mxu0 0
        %1601 = vmatpush1.bf16.msra.mxu0 0
        %1602 = vmatprep.subr.bf16.mxu0 0
        %1603 = vmatpush1.bf16.msra.mxu0 0
        %1604 = vmatprep.subr.bf16.mxu0 0
        %1605 = vmatpush1.bf16.msra.mxu0 0
        %1606 = vmatprep.subr.bf16.mxu0 0
        %1607 = vmatpush1.bf16.msra.mxu0 0
        %1608 = vmatprep.subr.bf16.mxu0 0
        %1609 = vmatpush1.bf16.msra.mxu0 0
        %1610 = vmatprep.subr.bf16.mxu0 0
        %1611 = vmatpush1.bf16.msra.mxu0 0
        %1612 = vmatprep.subr.bf16.mxu0 0
        %1613 = vmatpush1.bf16.msra.mxu0 %v1594
        %1614 = vmatprep.subr.bf16.mxu0 0
        %1615 = vmatpush1.bf16.msra.mxu0 %v1593
        %1616 = vmatprep.subr.bf16.mxu0 0
        %1617 = vmatpush2.bf16.msra.mxu0 0
        %1618 = vmatprep.subr.bf16.mxu0 0
        %1619 = vmatpush2.bf16.msra.mxu0 0
        %1620 = vmatprep.subr.bf16.mxu0 0
        %1621 = vmatpush2.bf16.msra.mxu0 0
        %1622 = vmatprep.subr.bf16.mxu0 0
        %1623 = vmatpush2.bf16.msra.mxu0 0
        %1624 = vmatprep.subr.bf16.mxu0 0
        %1625 = vmatpush2.bf16.msra.mxu0 0
        %1626 = vmatprep.subr.bf16.mxu0 0
        %1627 = vmatpush2.bf16.msra.mxu0 0
        %1628 = vmatprep.subr.bf16.mxu0 0
        %1629 = vmatpush2.bf16.msra.mxu0 0
        %1630 = vmatprep.subr.bf16.mxu0 0
        %1631 = vmatpush2.bf16.msra.mxu0 0
        %1632 = vmatprep.mubr.bf16.mxu0 0
        %1633 = vmatmul.mubr.bf16.gmra.mxu0 %v1598
        %v1634 = vpop.f32.mrf.mxu0
        %v1635 = vadd.f32 %v1583, %v1634
        %v1636 = vpop.f32.mrf.mxu0
        %v1637 = vpop.f32.mrf.mxu0
        %v1638 = vpop.f32.mrf.mxu0
        %1639 = vdwg.mxu0
        %v1640 = vmax.f32 %v1635, 0.0
        %v1641 = vpack.c.bf16 %v1640, %v1640
        %v1642 = vld [vmem:[%s11] sm:$0xf]
        %v1643 = vld [vmem:[%s11 + $0x4] sm:$0xf]
        %v1644 = vld [vmem:[%s11 + $0x8] sm:$0xf]
        %v1645 = vld [vmem:[%s11 + $0xc] sm:$0xf]
        %v1646 = vld [vmem:[%s11 + $0x10] sm:$0xf]
        %v1647 = vld [vmem:[%s11 + $0x14] sm:$0xf]
        %v1648 = vld [vmem:[%s11 + $0x18] sm:$0xf]
        %v1649 = vld [vmem:[%s11 + $0x1c] sm:$0xf]
        %v1650 = vld [vmem:[%s12] sm:$0x1]
        %v1652 = vlaneseq
        %v1653 = vshrl.u32 %v1652, 7
        %v1654 = vsub.s32 0, %v1653
        %v1655 = vrot.slane %v1650, %v1654
        %v1665 = vunpack.c.l.b16 %v1642
        %v1666 = vunpack.c.l.b16 %v1643
        %v1667 = vunpack.c.l.b16 %v1644
        %v1668 = vunpack.c.l.b16 %v1645
        %v1669 = vunpack.c.l.b16 %v1646
        %v1670 = vunpack.c.l.b16 %v1647
        %v1671 = vunpack.c.l.b16 %v1648
        %v1672 = vunpack.c.l.b16 %v1649
        %v1673 = vpack.c.b16 %v1666, %v1665
        %v1674 = vpack.c.b16 %v1668, %v1667
        %v1675 = vpack.c.b16 %v1670, %v1669
        %v1676 = vpack.c.b16 %v1672, %v1671
        %vm1681 = vcmask 523264
        %v1683 = vsel %vm1681, %v1641, 0
        %1685 = vmatprep.subr.bf16.mxu0 0
        %1686 = vmatpush1.bf16.msra.mxu0 0
        %1687 = vmatprep.subr.bf16.mxu0 0
        %1688 = vmatpush1.bf16.msra.mxu0 0
        %1689 = vmatprep.subr.bf16.mxu0 0
        %1690 = vmatpush1.bf16.msra.mxu0 0
        %1691 = vmatprep.subr.bf16.mxu0 0
        %1692 = vmatpush1.bf16.msra.mxu0 0
        %1693 = vmatprep.subr.bf16.mxu0 0
        %1694 = vmatpush1.bf16.msra.mxu0 %v1676
        %1695 = vmatprep.subr.bf16.mxu0 0
        %1696 = vmatpush1.bf16.msra.mxu0 %v1675
        %1697 = vmatprep.subr.bf16.mxu0 0
        %1698 = vmatpush1.bf16.msra.mxu0 %v1674
        %1699 = vmatprep.subr.bf16.mxu0 0
        %1700 = vmatpush1.bf16.msra.mxu0 %v1673
        %1701 = vmatprep.subr.bf16.mxu0 0
        %1702 = vmatpush2.bf16.msra.mxu0 0
        %1703 = vmatprep.subr.bf16.mxu0 0
        %1704 = vmatpush2.bf16.msra.mxu0 0
        %1705 = vmatprep.subr.bf16.mxu0 0
        %1706 = vmatpush2.bf16.msra.mxu0 0
        %1707 = vmatprep.subr.bf16.mxu0 0
        %1708 = vmatpush2.bf16.msra.mxu0 0
        %1709 = vmatprep.subr.bf16.mxu0 0
        %1710 = vmatpush2.bf16.msra.mxu0 0
        %1711 = vmatprep.subr.bf16.mxu0 0
        %1712 = vmatpush2.bf16.msra.mxu0 0
        %1713 = vmatprep.subr.bf16.mxu0 0
        %1714 = vmatpush2.bf16.msra.mxu0 0
        %1715 = vmatprep.subr.bf16.mxu0 0
        %1716 = vmatpush2.bf16.msra.mxu0 0
        %1717 = vmatprep.mubr.bf16.mxu0 0
        %1718 = vmatmul.mubr.bf16.gmra.mxu0 %v1683
        %v1719 = vpop.f32.mrf.mxu0
        %v1720 = vadd.f32 %v1655, %v1719
        %v1721 = vpop.f32.mrf.mxu0
        %v1722 = vpop.f32.mrf.mxu0
        %v1723 = vpop.f32.mrf.mxu0
        %1724 = vdwg.mxu0
        %v1725 = vadd.f32 %v1572, %v1720
        %v1726 = vld [vmem:[%s13] sm:$0x1]
        %v1727 = vld [vmem:[%s14] sm:$0x1]
        %v1728 = vsel %vm641, %v1725, 0.0
        %1729 = vadd.xlane.f32.xlu0 %v1728
        %v1730 = vpop.xlane.xlu0 %1729
        %v1731 = vmul.f32 %v1730, %v1548
        %v1732 = vsub.f32 %v1725, %v1731
        %v1733 = vmul.f32 %v1732, %v1732
        %v1734 = vsel %vm641, %v1733, 0.0
        %1735 = vadd.xlane.f32.xlu0 %v1734
        %v1736 = vpop.xlane.xlu0 %1735
        %v1737 = vmul.f32 %v1736, %v1548
        %v1738 = vadd.f32 %v1737, 1e-05
        %v1739 = vrsqrt.pop %v1738
        %v1740 = vmul.f32 %v1732, %v1739
        %v1742 = vlaneseq
        %v1743 = vshrl.u32 %v1742, 7
        %v1744 = vsub.s32 0, %v1743
        %v1745 = vrot.slane %v1726, %v1744
        %v1747 = vmul.f32 %v1740, %v1745
        %v1749 = vlaneseq
        %v1750 = vshrl.u32 %v1749, 7
        %v1751 = vsub.s32 0, %v1750
        %v1752 = vrot.slane %v1727, %v1751
        %v1754 = vadd.f32 %v1747, %v1752
        %1755 = vst.msk [vmem:[%s620] sm:$0xff] %vm641, %v1754
        %s1756 = sand.u32 %s375, 1
        %s1757 = scalar_lea.sflag [#allocation5], %s1756
        %s1758 = sand.u32 %s375, 1
        %s1759 = smul.addr %s1758, 8
        %s1760 = scalar_lea.vmem [#allocation14], %s1759
        // Predicated region
        $region105: #{tpu_custom_call.1} parent=79 // pred_check
          %p1761 = pneg %p385
        $region106: #{tpu_custom_call.1} parent=79 // pred_check_branch
          %1763 = sbr.rel (%p1761) target = $region108
        $region107: #{tpu_custom_call.1} parent=79 // pred_region
          %s1765 = ssub.s32 128, 128
          %1766 = vsyncadd %s1757, %s1765
          %s1767 = smul.addr %s37, 128
          %s1768 = scalar_lea.hbm %s15, %s1767
          %s1770 = sshll.u32 %s1760, 4
          %s1771 = int_to_ptr.vmem [resolvable:$true] %s1770
          %1773 = dma.vmem_to_hbm [thread:$0]  %s1771, 128, %s1768, %s1757
        $region108: #{tpu_custom_call.1} parent=79 // pred_fallthru
          _
      $region80: #{tpu_custom_call.1} parent=5 // pred_fallthru
        _
      %p1774 = scmp.le.s32.totalorder 2, %s32
      // Predicated region
      $region109: #{tpu_custom_call.1} parent=5 // pred_check
        %p1775 = pneg %p1774
      $region110: #{tpu_custom_call.1} parent=5 // pred_check_branch
        %1777 = sbr.rel (%p1775) target = $region112
      $region111: #{tpu_custom_call.1} parent=5 // pred_region
        %s1778 = ssub.s32 %s32, 2
        // Predicated region
        $region113: #{tpu_custom_call.1} parent=111 // pred_check
          %p1779 = pneg %p391
        $region114: #{tpu_custom_call.1} parent=111 // pred_check_branch
          %1781 = sbr.rel (%p1779) target = $region116
        $region115: #{tpu_custom_call.1} parent=111 // pred_region
          %s1782 = sand.u32 %s376, 1
          %s1783 = scalar_lea.sflag [#allocation5], %s1782
          %s1784 = sand.u32 %s376, 1
          %s1785 = smul.addr %s1784, 8
          %s1786 = scalar_lea.vmem [#allocation14], %s1785
          %1787 = dma.done %s1783, 128
        $region116: #{tpu_custom_call.1} parent=111 // pred_fallthru
          _
      $region112: #{tpu_custom_call.1} parent=5 // pred_fallthru
        _
    $region6: #{tpu_custom_call.1} parent=1 // loop_footer
      %s36 = sadd.s32 1, %s32
    $region7: #{tpu_custom_call.1} parent=1 // loop_footer_branch
      %31 = sbr.rel target = $region3
    $region8: #{tpu_custom_call.1} parent=1 // loop_exit
      _
    %1788 = vsyncpa [#allocation4], 1
    %s1789 = scalar_lea.sflag [#allocation4], 1
    %1790 = vsyncpa %s1789, 1
    %1791 = vsyncpa [#allocation7], 1
    %s1792 = scalar_lea.sflag [#allocation7], 1
    %1793 = vsyncpa %s1792, 1
    %1794 = vsyncpa [#allocation10], 1
    %1795 = vsyncpa [#allocation13], 1
    %1796 = vsyncpa [#allocation5], 1
    %s1797 = scalar_lea.sflag [#allocation5], 1
    %1798 = vsyncpa %s1797, 1

</llo_original>
